<compile_context>
chip_gen: v7x
topology: tpu7x:2x2x1
jax: 0.10.0
libtpu: 0.0.40
codegen_flags: <defaults>
</compile_context>

<pallas_src>
import jax
import jax.numpy as jnp
from jax.experimental import pallas as pl
from jax.experimental.pallas import tpu as pltpu

INPUT_DIM = 3
SH_ORDER = 2
NUM_SH_COEFFS = (SH_ORDER + 1) ** 2          # 9
OUT_DIM = 3 * NUM_SH_COEFFS                  # 27
HIDDEN = 256


def _mlp_kernel(x_ref, w1_ref, b1_ref, w2_ref, b2_ref, w3_ref, b3_ref, o_ref):
    # Fused 3-layer MLP on one row-tile of x. Matmuls are bf16 inputs with f32
    # accumulation on the MXU; bias-add/ReLU are f32 VPU elementwise ops.
    x = x_ref[...].astype(jnp.bfloat16)                        # (tn, 3)
    h = jnp.dot(x, w1_ref[...], preferred_element_type=jnp.float32)
    h = jnp.maximum(h + b1_ref[...], 0.0)                      # (tn, 256) f32
    h = jnp.dot(h.astype(jnp.bfloat16), w2_ref[...],
                preferred_element_type=jnp.float32)
    h = jnp.maximum(h + b2_ref[...], 0.0)                      # (tn, 256) f32
    o = jnp.dot(h.astype(jnp.bfloat16), w3_ref[...],
                preferred_element_type=jnp.float32)
    o_ref[...] = (o + b3_ref[...]).astype(o_ref.dtype)         # (tn, 27)


def sh_predictor_forward(x, params, *, row_tile=1024):
    """x: (N, INPUT_DIM) float32.  Returns (N, 3, NUM_SH_COEFFS) float32.

    row_tile: rows processed per grid step. 1024 is safe on all chips
    (≈3 MiB of VMEM-resident tiles/intermediates, well under v5e's 16 MiB
    default scoped VMEM); sweep 512-2048 for peak throughput at large N.
    """
    w1, b1, w2, b2, w3, b3 = params
    n = x.shape[0]

    grid = (pl.cdiv(n, row_tile),)   # ragged last block: padded load, masked store

    out = pl.pallas_call(
        _mlp_kernel,
        out_shape=jax.ShapeDtypeStruct((n, OUT_DIM), jnp.float32),
        grid_spec=pltpu.PrefetchScalarGridSpec(
            num_scalar_prefetch=0,
            grid=grid,
            in_specs=[
                pl.BlockSpec((row_tile, INPUT_DIM), lambda i: (i, 0)),   # x tile
                pl.BlockSpec((INPUT_DIM, HIDDEN), lambda i: (0, 0)),     # w1 (bf16)
                pl.BlockSpec((1, HIDDEN), lambda i: (0, 0)),             # b1 (f32)
                pl.BlockSpec((HIDDEN, HIDDEN), lambda i: (0, 0)),        # w2 (bf16)
                pl.BlockSpec((1, HIDDEN), lambda i: (0, 0)),             # b2 (f32)
                pl.BlockSpec((HIDDEN, OUT_DIM), lambda i: (0, 0)),       # w3 (bf16)
                pl.BlockSpec((1, OUT_DIM), lambda i: (0, 0)),            # b3 (f32)
            ],
            out_specs=pl.BlockSpec((row_tile, OUT_DIM), lambda i: (i, 0)),
        ),
        compiler_params=pltpu.CompilerParams(
            dimension_semantics=("parallel",)),   # shards rows across TCs (v7x)
    )(x, w1, b1, w2, b2, w3, b3)

    return out.reshape(-1, 3, NUM_SH_COEFFS)


def init_params(key):
    """Deterministic init mirroring nn.Linear's kaiming-uniform fan_in bounds.

    Weights are stored as (in_features, out_features) and cast to bf16 (the
    kernel's matmul input dtype); biases stay f32."""
    def linear(k, fan_in, fan_out):
        kw, kb = jax.random.split(k)
        bound = 1.0 / jnp.sqrt(fan_in)
        w = jax.random.uniform(kw, (fan_in, fan_out), jnp.float32, -bound, bound)
        b = jax.random.uniform(kb, (1, fan_out), jnp.float32, -bound, bound)
        return w.astype(jnp.bfloat16), b

    k1, k2, k3 = jax.random.split(key, 3)
    w1, b1 = linear(k1, INPUT_DIM, HIDDEN)
    w2, b2 = linear(k2, HIDDEN, HIDDEN)
    w3, b3 = linear(k3, HIDDEN, OUT_DIM)
    return (w1, b1, w2, b2, w3, b3)


def reference_forward(x, params):
    """Pure-JAX reference with identical numerics (bf16 matmul inputs, f32 acc)."""
    w1, b1, w2, b2, w3, b3 = params
    h = jnp.dot(x.astype(jnp.bfloat16), w1,
                preferred_element_type=jnp.float32) + b1
    h = jnp.maximum(h, 0.0)
    h = jnp.dot(h.astype(jnp.bfloat16), w2,
                preferred_element_type=jnp.float32) + b2
    h = jnp.maximum(h, 0.0)
    o = jnp.dot(h.astype(jnp.bfloat16), w3,
                preferred_element_type=jnp.float32) + b3
    return o.reshape(-1, 3, NUM_SH_COEFFS)


if __name__ == "__main__":
    key = jax.random.PRNGKey(0)
    k_params, k_x = jax.random.split(key)

    params = init_params(k_params)
    N = 600  # small; not a multiple of the tile -> exercises the ragged path
    x = jax.random.normal(k_x, (N, INPUT_DIM), jnp.float32)

    ref = reference_forward(x, params)

    # Multi-step grid with a ragged last block (256, 256, 88 rows).
    out_small_tile = jax.block_until_ready(
        sh_predictor_forward(x, params, row_tile=256))
    # Default tile (single block larger than the array).
    out_default = jax.block_until_ready(sh_predictor_forward(x, params))

    for out in (out_small_tile, out_default):
        assert out.shape == (N, 3, NUM_SH_COEFFS), out.shape
        assert jnp.allclose(out, ref, atol=1e-3, rtol=1e-3), "mismatch vs reference"

    print("KERNEL_OK")
</pallas_src>

<mosaic_0001>
module attributes {stable_mosaic.version = 11 : i64} {
  func.func @_mlp_kernel(%arg0: i32, %arg1: memref<256x3xf32, #tpu.memory_space<vmem>>, %arg2: memref<3x256xbf16, #tpu.memory_space<vmem>>, %arg3: memref<1x256xf32, #tpu.memory_space<vmem>>, %arg4: memref<256x256xbf16, #tpu.memory_space<vmem>>, %arg5: memref<1x256xf32, #tpu.memory_space<vmem>>, %arg6: memref<256x27xbf16, #tpu.memory_space<vmem>>, %arg7: memref<1x27xf32, #tpu.memory_space<vmem>>, %arg8: memref<256x27xf32, #tpu.memory_space<vmem>>) attributes {dimension_semantics = [#tpu.dimension_semantics<parallel>], iteration_bounds = array<i64: 3>, scalar_prefetch = 0 : i64, scratch_operands = 0 : i64, tpu.core_type = #tpu.core_type<tc>, window_params = [{transform_indices = @transform_0, window_bounds = array<i64: 256, 3>}, {pipeline_mode = #tpu.pipeline_mode<synchronous>, transform_indices = @transform_1, window_bounds = array<i64: 3, 256>}, {pipeline_mode = #tpu.pipeline_mode<synchronous>, transform_indices = @transform_2, window_bounds = array<i64: 1, 256>}, {pipeline_mode = #tpu.pipeline_mode<synchronous>, transform_indices = @transform_3, window_bounds = array<i64: 256, 256>}, {pipeline_mode = #tpu.pipeline_mode<synchronous>, transform_indices = @transform_4, window_bounds = array<i64: 1, 256>}, {pipeline_mode = #tpu.pipeline_mode<synchronous>, transform_indices = @transform_5, window_bounds = array<i64: 256, 27>}, {pipeline_mode = #tpu.pipeline_mode<synchronous>, transform_indices = @transform_6, window_bounds = array<i64: 1, 27>}, {transform_indices = @transform_7, window_bounds = array<i64: 256, 27>}]} {
    %c0 = arith.constant 0 : index
    %c0_0 = arith.constant 0 : index
    %0 = vector.load %arg1[%c0, %c0_0] : memref<256x3xf32, #tpu.memory_space<vmem>>, vector<256x3xf32>
    %1 = arith.truncf %0 : vector<256x3xf32> to vector<256x3xbf16>
    %c0_1 = arith.constant 0 : index
    %c0_2 = arith.constant 0 : index
    %2 = vector.load %arg2[%c0_1, %c0_2] : memref<3x256xbf16, #tpu.memory_space<vmem>>, vector<3x256xbf16>
    %cst = arith.constant dense<0.000000e+00> : vector<256x256xf32>
    %3 = tpu.matmul %1, %2, %cst {dimension_numbers = #tpu.dot_dimension_numbers<[1], [0], [0], [1], [0, 0, 1, 1], [], []>} : vector<256x3xbf16>, vector<3x256xbf16>, vector<256x256xf32> -> vector<256x256xf32>
    %c0_3 = arith.constant 0 : index
    %c0_4 = arith.constant 0 : index
    %4 = vector.load %arg3[%c0_3, %c0_4] : memref<1x256xf32, #tpu.memory_space<vmem>>, vector<1x256xf32>
    %5 = vector.broadcast %4 : vector<1x256xf32> to vector<256x256xf32>
    %6 = arith.addf %3, %5 : vector<256x256xf32>
    %cst_5 = arith.constant 0.000000e+00 : f32
    %7 = vector.broadcast %cst_5 : f32 to vector<256x256xf32>
    %8 = arith.maximumf %6, %7 : vector<256x256xf32>
    %9 = arith.truncf %8 : vector<256x256xf32> to vector<256x256xbf16>
    %c0_6 = arith.constant 0 : index
    %c0_7 = arith.constant 0 : index
    %10 = vector.load %arg4[%c0_6, %c0_7] : memref<256x256xbf16, #tpu.memory_space<vmem>>, vector<256x256xbf16>
    %cst_8 = arith.constant dense<0.000000e+00> : vector<256x256xf32>
    %11 = tpu.matmul %9, %10, %cst_8 {dimension_numbers = #tpu.dot_dimension_numbers<[1], [0], [0], [1], [0, 0, 1, 1], [], []>} : vector<256x256xbf16>, vector<256x256xbf16>, vector<256x256xf32> -> vector<256x256xf32>
    %c0_9 = arith.constant 0 : index
    %c0_10 = arith.constant 0 : index
    %12 = vector.load %arg5[%c0_9, %c0_10] : memref<1x256xf32, #tpu.memory_space<vmem>>, vector<1x256xf32>
    %13 = vector.broadcast %12 : vector<1x256xf32> to vector<256x256xf32>
    %14 = arith.addf %11, %13 : vector<256x256xf32>
    %cst_11 = arith.constant 0.000000e+00 : f32
    %15 = vector.broadcast %cst_11 : f32 to vector<256x256xf32>
    %16 = arith.maximumf %14, %15 : vector<256x256xf32>
    %17 = arith.truncf %16 : vector<256x256xf32> to vector<256x256xbf16>
    %c0_12 = arith.constant 0 : index
    %c0_13 = arith.constant 0 : index
    %18 = vector.load %arg6[%c0_12, %c0_13] : memref<256x27xbf16, #tpu.memory_space<vmem>>, vector<256x27xbf16>
    %cst_14 = arith.constant dense<0.000000e+00> : vector<256x27xf32>
    %19 = tpu.matmul %17, %18, %cst_14 {dimension_numbers = #tpu.dot_dimension_numbers<[1], [0], [0], [1], [0, 0, 1, 1], [], []>} : vector<256x256xbf16>, vector<256x27xbf16>, vector<256x27xf32> -> vector<256x27xf32>
    %c0_15 = arith.constant 0 : index
    %c0_16 = arith.constant 0 : index
    %20 = vector.load %arg7[%c0_15, %c0_16] : memref<1x27xf32, #tpu.memory_space<vmem>>, vector<1x27xf32>
    %21 = vector.broadcast %20 : vector<1x27xf32> to vector<256x27xf32>
    %22 = arith.addf %19, %21 : vector<256x27xf32>
    %c0_17 = arith.constant 0 : index
    %c0_18 = arith.constant 0 : index
    %23 = vector.load %arg8[%c0_17, %c0_18] : memref<256x27xf32, #tpu.memory_space<vmem>>, vector<256x27xf32>
    tpu.vector_store %arg8[%c0_17, %c0_18], %22 {strides = array<i32>} : memref<256x27xf32, #tpu.memory_space<vmem>>, vector<256x27xf32>,
    return
  }
  func.func @transform_0(%arg0: i32) -> (i32, i32) {
    %c0_i32 = arith.constant 0 : i32
    %c0_i32_0 = arith.constant 0 : i32
    return %arg0, %c0_i32 : i32, i32
  }
  func.func @transform_1(%arg0: i32) -> (i32, i32) {
    %c0_i32 = arith.constant 0 : i32
    %c0_i32_0 = arith.constant 0 : i32
    %c0_i32_1 = arith.constant 0 : i32
    return %c0_i32, %c0_i32_0 : i32, i32
  }
  func.func @transform_2(%arg0: i32) -> (i32, i32) {
    %c0_i32 = arith.constant 0 : i32
    %c0_i32_0 = arith.constant 0 : i32
    %c0_i32_1 = arith.constant 0 : i32
    return %c0_i32, %c0_i32_0 : i32, i32
  }
  func.func @transform_3(%arg0: i32) -> (i32, i32) {
    %c0_i32 = arith.constant 0 : i32
    %c0_i32_0 = arith.constant 0 : i32
    %c0_i32_1 = arith.constant 0 : i32
    return %c0_i32, %c0_i32_0 : i32, i32
  }
  func.func @transform_4(%arg0: i32) -> (i32, i32) {
    %c0_i32 = arith.constant 0 : i32
    %c0_i32_0 = arith.constant 0 : i32
    %c0_i32_1 = arith.constant 0 : i32
    return %c0_i32, %c0_i32_0 : i32, i32
  }
  func.func @transform_5(%arg0: i32) -> (i32, i32) {
    %c0_i32 = arith.constant 0 : i32
    %c0_i32_0 = arith.constant 0 : i32
    %c0_i32_1 = arith.constant 0 : i32
    return %c0_i32, %c0_i32_0 : i32, i32
  }
  func.func @transform_6(%arg0: i32) -> (i32, i32) {
    %c0_i32 = arith.constant 0 : i32
    %c0_i32_0 = arith.constant 0 : i32
    %c0_i32_1 = arith.constant 0 : i32
    return %c0_i32, %c0_i32_0 : i32, i32
  }
  func.func @transform_7(%arg0: i32) -> (i32, i32) {
    %c0_i32 = arith.constant 0 : i32
    %c0_i32_0 = arith.constant 0 : i32
    return %arg0, %c0_i32 : i32, i32
  }
}

</mosaic_0001>

<llo_original>
// kernel: tpu_custom_call.1
$region0: #{tpu_custom_call.1}
  #allocation0 [shape = 'u32[]', space=smem, size = 0x4, offset = 0x4, fixed_abs, tag = 'smem constant byte address 0x4 - core index']
  #allocation1 [shape = 'u32[144,128]{1,0:T(1,128)}', space=vmem, size = 0x12000, scoped, tag = 'internal scratch']
  %s0 = inlined_call_operand.vmem [shape: f32[600,3], index: 0, kind: input, shape index: {}]
  %s1 = inlined_call_operand.vmem [shape: bf16[3,256], index: 1, kind: input, shape index: {}]
  %s2 = inlined_call_operand.vmem [shape: f32[1,256], index: 2, kind: input, shape index: {}]
  %s3 = inlined_call_operand.vmem [shape: bf16[256,256], index: 3, kind: input, shape index: {}]
  %s4 = inlined_call_operand.vmem [shape: f32[1,256], index: 4, kind: input, shape index: {}]
  %s5 = inlined_call_operand.vmem [shape: bf16[256,27], index: 5, kind: input, shape index: {}]
  %s6 = inlined_call_operand.vmem [shape: f32[1,27], index: 6, kind: input, shape index: {}]
  %s7 = inlined_call_operand.vmem [shape: f32[600,27], index: 7, kind: output, shape index: {}]
  %s8 = sld [smem:[#allocation0]]
  $region109: #{tpu_custom_call.1} parent=0
    _
  %s10 = ssub.s32 1, %s8
  %s11 = scalar_select 0, %s10, %s8
  $region1: #{tpu_custom_call.1} parent=0
    #allocation2 [shape = 'u8[262144]{0}', space=vmem, size = 0x40000, scoped, tag = 'output window, operand 0']
    loop: start=0, step=1, limit=5
    $region2: #{tpu_custom_call.1} parent=1 // loop_pre_header
      _
    $region3: #{tpu_custom_call.1} parent=1 // loop_header
      %s13 = sphi 0, %s17
      %p14 = scmp.ge.s32.totalorder %s13, 5
      %s23 = sphi 0, %s25
      %s26 = sphi 0, %s23
      %s27 = sphi 0, %s26
      %s43 = sphi 0, %s27
      %s47 = sphi 0, %s47
      %s49 = sphi 0, %s47
      %s50 = sphi 0, %s49
      %s64 = sphi 0, %s50
      %s68 = sphi 0, %s68
      %s70 = sphi 0, %s68
      %s71 = sphi 0, %s70
      %s85 = sphi 0, %s71
      %s89 = sphi 0, %s89
      %s91 = sphi 0, %s89
      %s92 = sphi 0, %s91
      %s106 = sphi 0, %s92
      %s110 = sphi 0, %s110
      %s112 = sphi 0, %s110
      %s113 = sphi 0, %s112
      %s127 = sphi 0, %s113
      %s131 = sphi 0, %s131
      %s133 = sphi 0, %s131
      %s134 = sphi 0, %s133
      %s148 = sphi 0, %s134
      %s152 = sphi 0, %s152
      %s154 = sphi 0, %s152
      %s155 = sphi 0, %s154
      %s169 = sphi 0, %s155
      %s175 = sphi 0, %s177
      %s178 = sphi 0, %s175
      %s179 = sphi 0, %s178
      %s195 = sphi 0, %s179
    $region4: #{tpu_custom_call.1} parent=1 // loop_header_branch
      %16 = sbr.rel (%p14) target = $region8
    $region5: #{tpu_custom_call.1} parent=1 // loop_body
      %s18 = ssub.s32 %s13, 1
      %s19 = ssub.s32 %s13, 2
      %s20 = sadd.s32 %s13, 1
      %s21 = ssub.s32 %s13, %s20
      %p22 = scmp.eq.s32.totalorder %s21, 0
      %s24 = sadd.s32 %s23, 1
      %s25 = scalar_select %p22, %s23, %s24
      %p28 = pneg %p22
      %p29 = scmp.eq.s32.totalorder %s13, 2
      %p30 = por %p28, %p29
      %p31 = scmp.ne.s32.totalorder %s23, %s26
      %p32 = scmp.eq.s32.totalorder %s13, 0
      %p33 = por %p31, %p32
      %p34 = scmp.ne.s32.totalorder %s23, %s26
      %p35 = scmp.eq.s32.totalorder %s18, 2
      %p36 = por %p34, %p35
      %p37 = scmp.ne.s32.totalorder %s26, %s27
      %p38 = scmp.eq.s32.totalorder %s18, 0
      %p39 = por %p37, %p38
      %p40 = scmp.ne.s32.totalorder %s26, %s27
      %p41 = scmp.eq.s32.totalorder %s19, 2
      %p42 = por %p40, %p41
      %p44 = scmp.ne.s32.totalorder %s27, %s43
      %p45 = scmp.eq.s32.totalorder %s19, 0
      %p46 = por %p44, %p45
      %s48 = sadd.s32 %s47, 1
      %p51 = scmp.eq.s32.totalorder %s13, 2
      %p52 = scmp.ne.s32.totalorder %s47, %s49
      %p53 = scmp.eq.s32.totalorder %s13, 0
      %p54 = por %p52, %p53
      %p55 = scmp.ne.s32.totalorder %s47, %s49
      %p56 = scmp.eq.s32.totalorder %s18, 2
      %p57 = por %p55, %p56
      %p58 = scmp.ne.s32.totalorder %s49, %s50
      %p59 = scmp.eq.s32.totalorder %s18, 0
      %p60 = por %p58, %p59
      %p61 = scmp.ne.s32.totalorder %s49, %s50
      %p62 = scmp.eq.s32.totalorder %s19, 2
      %p63 = por %p61, %p62
      %p65 = scmp.ne.s32.totalorder %s50, %s64
      %p66 = scmp.eq.s32.totalorder %s19, 0
      %p67 = por %p65, %p66
      %s69 = sadd.s32 %s68, 1
      %p72 = scmp.eq.s32.totalorder %s13, 2
      %p73 = scmp.ne.s32.totalorder %s68, %s70
      %p74 = scmp.eq.s32.totalorder %s13, 0
      %p75 = por %p73, %p74
      %p76 = scmp.ne.s32.totalorder %s68, %s70
      %p77 = scmp.eq.s32.totalorder %s18, 2
      %p78 = por %p76, %p77
      %p79 = scmp.ne.s32.totalorder %s70, %s71
      %p80 = scmp.eq.s32.totalorder %s18, 0
      %p81 = por %p79, %p80
      %p82 = scmp.ne.s32.totalorder %s70, %s71
      %p83 = scmp.eq.s32.totalorder %s19, 2
      %p84 = por %p82, %p83
      %p86 = scmp.ne.s32.totalorder %s71, %s85
      %p87 = scmp.eq.s32.totalorder %s19, 0
      %p88 = por %p86, %p87
      %s90 = sadd.s32 %s89, 1
      %p93 = scmp.eq.s32.totalorder %s13, 2
      %p94 = scmp.ne.s32.totalorder %s89, %s91
      %p95 = scmp.eq.s32.totalorder %s13, 0
      %p96 = por %p94, %p95
      %p97 = scmp.ne.s32.totalorder %s89, %s91
      %p98 = scmp.eq.s32.totalorder %s18, 2
      %p99 = por %p97, %p98
      %p100 = scmp.ne.s32.totalorder %s91, %s92
      %p101 = scmp.eq.s32.totalorder %s18, 0
      %p102 = por %p100, %p101
      %p103 = scmp.ne.s32.totalorder %s91, %s92
      %p104 = scmp.eq.s32.totalorder %s19, 2
      %p105 = por %p103, %p104
      %p107 = scmp.ne.s32.totalorder %s92, %s106
      %p108 = scmp.eq.s32.totalorder %s19, 0
      %p109 = por %p107, %p108
      %s111 = sadd.s32 %s110, 1
      %p114 = scmp.eq.s32.totalorder %s13, 2
      %p115 = scmp.ne.s32.totalorder %s110, %s112
      %p116 = scmp.eq.s32.totalorder %s13, 0
      %p117 = por %p115, %p116
      %p118 = scmp.ne.s32.totalorder %s110, %s112
      %p119 = scmp.eq.s32.totalorder %s18, 2
      %p120 = por %p118, %p119
      %p121 = scmp.ne.s32.totalorder %s112, %s113
      %p122 = scmp.eq.s32.totalorder %s18, 0
      %p123 = por %p121, %p122
      %p124 = scmp.ne.s32.totalorder %s112, %s113
      %p125 = scmp.eq.s32.totalorder %s19, 2
      %p126 = por %p124, %p125
      %p128 = scmp.ne.s32.totalorder %s113, %s127
      %p129 = scmp.eq.s32.totalorder %s19, 0
      %p130 = por %p128, %p129
      %s132 = sadd.s32 %s131, 1
      %p135 = scmp.eq.s32.totalorder %s13, 2
      %p136 = scmp.ne.s32.totalorder %s131, %s133
      %p137 = scmp.eq.s32.totalorder %s13, 0
      %p138 = por %p136, %p137
      %p139 = scmp.ne.s32.totalorder %s131, %s133
      %p140 = scmp.eq.s32.totalorder %s18, 2
      %p141 = por %p139, %p140
      %p142 = scmp.ne.s32.totalorder %s133, %s134
      %p143 = scmp.eq.s32.totalorder %s18, 0
      %p144 = por %p142, %p143
      %p145 = scmp.ne.s32.totalorder %s133, %s134
      %p146 = scmp.eq.s32.totalorder %s19, 2
      %p147 = por %p145, %p146
      %p149 = scmp.ne.s32.totalorder %s134, %s148
      %p150 = scmp.eq.s32.totalorder %s19, 0
      %p151 = por %p149, %p150
      %s153 = sadd.s32 %s152, 1
      %p156 = scmp.eq.s32.totalorder %s13, 2
      %p157 = scmp.ne.s32.totalorder %s152, %s154
      %p158 = scmp.eq.s32.totalorder %s13, 0
      %p159 = por %p157, %p158
      %p160 = scmp.ne.s32.totalorder %s152, %s154
      %p161 = scmp.eq.s32.totalorder %s18, 2
      %p162 = por %p160, %p161
      %p163 = scmp.ne.s32.totalorder %s154, %s155
      %p164 = scmp.eq.s32.totalorder %s18, 0
      %p165 = por %p163, %p164
      %p166 = scmp.ne.s32.totalorder %s154, %s155
      %p167 = scmp.eq.s32.totalorder %s19, 2
      %p168 = por %p166, %p167
      %p170 = scmp.ne.s32.totalorder %s155, %s169
      %p171 = scmp.eq.s32.totalorder %s19, 0
      %p172 = por %p170, %p171
      %s173 = ssub.s32 %s13, %s20
      %p174 = scmp.eq.s32.totalorder %s173, 0
      %s176 = sadd.s32 %s175, 1
      %s177 = scalar_select %p174, %s175, %s176
      %p180 = pneg %p174
      %p181 = scmp.eq.s32.totalorder %s13, 2
      %p182 = por %p180, %p181
      %p183 = scmp.ne.s32.totalorder %s175, %s178
      %p184 = scmp.eq.s32.totalorder %s13, 0
      %p185 = por %p183, %p184
      %p186 = scmp.ne.s32.totalorder %s175, %s178
      %p187 = scmp.eq.s32.totalorder %s18, 2
      %p188 = por %p186, %p187
      %p189 = scmp.ne.s32.totalorder %s178, %s179
      %p190 = scmp.eq.s32.totalorder %s18, 0
      %p191 = por %p189, %p190
      %p192 = scmp.ne.s32.totalorder %s178, %s179
      %p193 = scmp.eq.s32.totalorder %s19, 2
      %p194 = por %p192, %p193
      %p196 = scmp.ne.s32.totalorder %s179, %s195
      %p197 = scmp.eq.s32.totalorder %s19, 0
      %p198 = por %p196, %p197
      %p199 = scmp.le.s32.totalorder 1, %s13
      %p200 = scmp.lt.s32.totalorder %s13, 4
      %p201 = pnand %p199, %p200
      %p202 = pneg %p201
      // Predicated region
      $region9: #{tpu_custom_call.1} parent=5 // pred_check
        _
      $region10: #{tpu_custom_call.1} parent=5 // pred_check_branch
        %204 = sbr.rel (%p201) target = $region12
      $region11: #{tpu_custom_call.1} parent=5 // pred_region
        %s205 = ssub.s32 %s13, 1
        // Predicated region
        $region13: #{tpu_custom_call.1} parent=11 // pred_check
          %p206 = pneg %p60
        $region14: #{tpu_custom_call.1} parent=11 // pred_check_branch
          %208 = sbr.rel (%p206) target = $region16
        $region15: #{tpu_custom_call.1} parent=11 // pred_region
          _
        $region16: #{tpu_custom_call.1} parent=11 // pred_fallthru
          _
        // Predicated region
        $region17: #{tpu_custom_call.1} parent=11 // pred_check
          %p209 = pneg %p81
        $region18: #{tpu_custom_call.1} parent=11 // pred_check_branch
          %211 = sbr.rel (%p209) target = $region20
        $region19: #{tpu_custom_call.1} parent=11 // pred_region
          _
        $region20: #{tpu_custom_call.1} parent=11 // pred_fallthru
          _
        // Predicated region
        $region21: #{tpu_custom_call.1} parent=11 // pred_check
          %p212 = pneg %p102
        $region22: #{tpu_custom_call.1} parent=11 // pred_check_branch
          %214 = sbr.rel (%p212) target = $region24
        $region23: #{tpu_custom_call.1} parent=11 // pred_region
          _
        $region24: #{tpu_custom_call.1} parent=11 // pred_fallthru
          _
        // Predicated region
        $region25: #{tpu_custom_call.1} parent=11 // pred_check
          %p215 = pneg %p123
        $region26: #{tpu_custom_call.1} parent=11 // pred_check_branch
          %217 = sbr.rel (%p215) target = $region28
        $region27: #{tpu_custom_call.1} parent=11 // pred_region
          _
        $region28: #{tpu_custom_call.1} parent=11 // pred_fallthru
          _
        // Predicated region
        $region29: #{tpu_custom_call.1} parent=11 // pred_check
          %p218 = pneg %p144
        $region30: #{tpu_custom_call.1} parent=11 // pred_check_branch
          %220 = sbr.rel (%p218) target = $region32
        $region31: #{tpu_custom_call.1} parent=11 // pred_region
          _
        $region32: #{tpu_custom_call.1} parent=11 // pred_fallthru
          _
        // Predicated region
        $region33: #{tpu_custom_call.1} parent=11 // pred_check
          %p221 = pneg %p165
        $region34: #{tpu_custom_call.1} parent=11 // pred_check_branch
          %223 = sbr.rel (%p221) target = $region36
        $region35: #{tpu_custom_call.1} parent=11 // pred_region
          _
        $region36: #{tpu_custom_call.1} parent=11 // pred_fallthru
          _
      $region12: #{tpu_custom_call.1} parent=5 // pred_fallthru
        _
      %p224 = scmp.lt.s32.totalorder %s13, 3
      // Predicated region
      $region37: #{tpu_custom_call.1} parent=5 // pred_check
        %p225 = pneg %p224
      $region38: #{tpu_custom_call.1} parent=5 // pred_check_branch
        %227 = sbr.rel (%p225) target = $region40
      $region39: #{tpu_custom_call.1} parent=5 // pred_region
        // Predicated region
        $region41: #{tpu_custom_call.1} parent=39 // pred_check
          %p228 = pneg %p33
        $region42: #{tpu_custom_call.1} parent=39 // pred_check_branch
          %230 = sbr.rel (%p228) target = $region44
        $region43: #{tpu_custom_call.1} parent=39 // pred_region
          %s231 = smul.u32 32, %s13
          %s232 = ssub.s32 75, %s231
          %p233 = scmp.lt.s32.totalorder %s232, 32
          %s234 = scalar_select %p233, %s232, 32
          %s235 = smul.u32 128, %s234
          %p236 = scmp.lt.s32.totalorder %s231, 74
          %s237 = scalar_select %p236, %s231, 74
          %s238 = smul.addr %s237, 8
          %s239 = scalar_lea.vmem %s0, %s238
          %s240 = smul.u32 32, %s13
          %s241 = ssub.s32 75, %s240
          %p242 = scmp.lt.s32.totalorder %s241, 32
          %s243 = scalar_select %p242, %s241, 32
          %s244 = smul.u32 128, %s243
        $region44: #{tpu_custom_call.1} parent=39 // pred_fallthru
          _
      $region40: #{tpu_custom_call.1} parent=5 // pred_fallthru
        _
      %p245 = scmp.le.s32.totalorder 1, %s13
      %p246 = scmp.lt.s32.totalorder %s13, 4
      %p247 = pnand %p245, %p246
      %p248 = pneg %p247
      // Predicated region
      $region45: #{tpu_custom_call.1} parent=5 // pred_check
        _
      $region46: #{tpu_custom_call.1} parent=5 // pred_check_branch
        %250 = sbr.rel (%p247) target = $region48
      $region47: #{tpu_custom_call.1} parent=5 // pred_region
        %s251 = ssub.s32 %s13, 1
        %s252 = smul.u32 32, %s18
        %s253 = ssub.s32 75, %s252
        %p254 = scmp.lt.s32.totalorder %s253, 32
        %s255 = scalar_select %p254, %s253, 32
        %s256 = smul.u32 128, %s255
        %p257 = scmp.lt.s32.totalorder %s252, 74
        %s258 = scalar_select %p257, %s252, 74
        %s259 = smul.addr %s258, 8
        %s260 = scalar_lea.vmem %s0, %s259
        %p261 = pneg %p39
        %p262 = pneg %p36
        %p263 = pneg %p60
        %p264 = pneg %p57
        %p265 = pneg %p81
        %p266 = pneg %p78
        %p267 = pneg %p102
        %p268 = pneg %p99
        %p269 = pneg %p123
        %p270 = pneg %p120
        %p271 = pneg %p144
        %p272 = pneg %p141
        %p273 = pneg %p165
        %p274 = pneg %p162
        %p275 = pneg %p191
        %p276 = pneg %p188
        %s277 = sand.u32 %s178, 1
        %s278 = sand.u32 %s178, 1
        %s279 = smul.addr %s278, 256
        %s280 = scalar_lea.vmem [#allocation2], %s279
        %s281 = smul.u32 32, %s18
        %s282 = ssub.s32 75, %s281
        %p283 = scmp.lt.s32.totalorder %s282, 32
        %s284 = scalar_select %p283, %s282, 32
        %s285 = smul.u32 128, %s284
        %p286 = scmp.lt.s32.totalorder %s281, 74
        %s287 = scalar_select %p286, %s281, 74
        %s288 = smul.addr %s287, 8
        %s289 = scalar_lea.vmem %s0, %s288
        %s290 = smul.u32 32, %s18
        %s291 = ssub.s32 75, %s290
        %p292 = scmp.lt.s32.totalorder %s291, 32
        %s293 = scalar_select %p292, %s291, 32
        %s294 = smul.u32 128, %s293
        %s295 = smul.u32 32, %s18
        %s296 = ssub.s32 75, %s295
        %p297 = scmp.lt.s32.totalorder %s296, 32
        %s298 = scalar_select %p297, %s296, 32
        %s299 = smul.u32 128, %s298
        %v301 = vld [vmem:[%s289] sm:$0xff]
        %v302 = vld [vmem:[%s289 + $0x8] sm:$0xff]
        %v303 = vld [vmem:[%s289 + $0x10] sm:$0xff]
        %v304 = vld [vmem:[%s289 + $0x18] sm:$0xff]
        %v305 = vld [vmem:[%s289 + $0x20] sm:$0xff]
        %v306 = vld [vmem:[%s289 + $0x28] sm:$0xff]
        %v307 = vld [vmem:[%s289 + $0x30] sm:$0xff]
        %v308 = vld [vmem:[%s289 + $0x38] sm:$0xff]
        %v309 = vld [vmem:[%s289 + $0x40] sm:$0xff]
        %v310 = vld [vmem:[%s289 + $0x48] sm:$0xff]
        %v311 = vld [vmem:[%s289 + $0x50] sm:$0xff]
        %v312 = vld [vmem:[%s289 + $0x58] sm:$0xff]
        %v313 = vld [vmem:[%s289 + $0x60] sm:$0xff]
        %v314 = vld [vmem:[%s289 + $0x68] sm:$0xff]
        %v315 = vld [vmem:[%s289 + $0x70] sm:$0xff]
        %v316 = vld [vmem:[%s289 + $0x78] sm:$0xff]
        %v317 = vld [vmem:[%s289 + $0x80] sm:$0xff]
        %v318 = vld [vmem:[%s289 + $0x88] sm:$0xff]
        %v319 = vld [vmem:[%s289 + $0x90] sm:$0xff]
        %v320 = vld [vmem:[%s289 + $0x98] sm:$0xff]
        %v321 = vld [vmem:[%s289 + $0xa0] sm:$0xff]
        %v322 = vld [vmem:[%s289 + $0xa8] sm:$0xff]
        %v323 = vld [vmem:[%s289 + $0xb0] sm:$0xff]
        %v324 = vld [vmem:[%s289 + $0xb8] sm:$0xff]
        %v325 = vld [vmem:[%s289 + $0xc0] sm:$0xff]
        %v326 = vld [vmem:[%s289 + $0xc8] sm:$0xff]
        %v327 = vld [vmem:[%s289 + $0xd0] sm:$0xff]
        %v328 = vld [vmem:[%s289 + $0xd8] sm:$0xff]
        %v329 = vld [vmem:[%s289 + $0xe0] sm:$0xff]
        %v330 = vld [vmem:[%s289 + $0xe8] sm:$0xff]
        %v331 = vld [vmem:[%s289 + $0xf0] sm:$0xff]
        %v332 = vld [vmem:[%s289 + $0xf8] sm:$0xff]
        %v333 = vpack.c.bf16 %v302, %v301
        %v334 = vpack.c.bf16 %v304, %v303
        %v335 = vpack.c.bf16 %v306, %v305
        %v336 = vpack.c.bf16 %v308, %v307
        %v337 = vpack.c.bf16 %v310, %v309
        %v338 = vpack.c.bf16 %v312, %v311
        %v339 = vpack.c.bf16 %v314, %v313
        %v340 = vpack.c.bf16 %v316, %v315
        %v341 = vpack.c.bf16 %v318, %v317
        %v342 = vpack.c.bf16 %v320, %v319
        %v343 = vpack.c.bf16 %v322, %v321
        %v344 = vpack.c.bf16 %v324, %v323
        %v345 = vpack.c.bf16 %v326, %v325
        %v346 = vpack.c.bf16 %v328, %v327
        %v347 = vpack.c.bf16 %v330, %v329
        %v348 = vpack.c.bf16 %v332, %v331
        %v349 = vld [vmem:[%s1] sm:$0xf]
        %v350 = vld [vmem:[%s2] sm:$0x3]
        %v352 = vlaneseq
        %v353 = vshrl.u32 %v352, 7
        %v354 = vsub.s32 0, %v353
        %v355 = vrot.slane %v350, %v354
        %v356 = vlaneseq
        %v357 = vshrl.u32 %v356, 7
        %v358 = vsub.s32 1, %v357
        %v359 = vrot.slane %v350, %v358
        %v364 = vunpack.c.l.s4 1983009808
        %v365 = vunpack.c.0.s8 %v364
        %v366 = vlaneseq
        %v367 = vshrl.u32 %v366, 7
        %v368 = vsub.s32 %v365, %v367
        %v369 = vrot.slane %v349, %v368
        %v370 = vcombine.high %v369, %v369
        %vm371 = vcmask 23552
        %v373 = vsel %vm371, %v333, 0
        %v376 = vsel %vm371, %v334, 0
        %v379 = vsel %vm371, %v335, 0
        %v382 = vsel %vm371, %v336, 0
        %v385 = vsel %vm371, %v337, 0
        %v388 = vsel %vm371, %v338, 0
        %v391 = vsel %vm371, %v339, 0
        %v394 = vsel %vm371, %v340, 0
        %v397 = vsel %vm371, %v341, 0
        %v400 = vsel %vm371, %v342, 0
        %v403 = vsel %vm371, %v343, 0
        %v406 = vsel %vm371, %v344, 0
        %v409 = vsel %vm371, %v345, 0
        %v412 = vsel %vm371, %v346, 0
        %v415 = vsel %vm371, %v347, 0
        %v418 = vsel %vm371, %v348, 0
        %vm420 = vcmask 1040384
        %vm421 = vcmask 1041408
        %v422 = vsel %vm420, 4294967295, 65535
        %v423 = vsel %vm421, %v422, 0
        %v425 = vand.u32 %v369, %v423
        %v428 = vand.u32 %v370, %v423
        %430 = vmatprep.subr.bf16.mxu0 %v428
        %431 = vmatpush1.bf16.msra.mxu0 %v425
        %432 = vmatprep.subr.bf16.mxu0 0
        %433 = vmatpush1.bf16.msra.mxu0 0
        %434 = vmatprep.subr.bf16.mxu0 0
        %435 = vmatpush1.bf16.msra.mxu0 0
        %436 = vmatprep.subr.bf16.mxu0 0
        %437 = vmatpush1.bf16.msra.mxu0 0
        %438 = vmatprep.subr.bf16.mxu0 0
        %439 = vmatpush1.bf16.msra.mxu0 0
        %440 = vmatprep.subr.bf16.mxu0 0
        %441 = vmatpush1.bf16.msra.mxu0 0
        %442 = vmatprep.subr.bf16.mxu0 0
        %443 = vmatpush1.bf16.msra.mxu0 0
        %444 = vmatprep.subr.bf16.mxu0 0
        %445 = vmatpush1.bf16.msra.mxu0 0
        %446 = vmatprep.subr.bf16.mxu0 0
        %447 = vmatpush1.bf16.msra.mxu0 0
        %448 = vmatprep.subr.bf16.mxu0 0
        %449 = vmatpush1.bf16.msra.mxu0 0
        %450 = vmatprep.subr.bf16.mxu0 0
        %451 = vmatpush1.bf16.msra.mxu0 0
        %452 = vmatprep.subr.bf16.mxu0 0
        %453 = vmatpush1.bf16.msra.mxu0 0
        %454 = vmatprep.subr.bf16.mxu0 0
        %455 = vmatpush1.bf16.msra.mxu0 0
        %456 = vmatprep.subr.bf16.mxu0 0
        %457 = vmatpush1.bf16.msra.mxu0 0
        %458 = vmatprep.subr.bf16.mxu0 0
        %459 = vmatpush1.bf16.msra.mxu0 0
        %460 = vmatprep.subr.bf16.mxu0 0
        %461 = vmatpush1.bf16.msra.mxu0 0
        %462 = vmatprep.mubr.bf16.mxu0 0
        %463 = vmatmul.mubr.bf16.gmra.mrb[0].mxu0 %v373
        %v464 = vpop.f32.mrb[0].mxu0
        %v465 = vadd.f32 %v355, %v464
        %v466 = vpop.f32.mrb[0].mxu0
        %v467 = vadd.f32 %v359, %v466
        %v468 = vpop.f32.mrb[0].mxu0
        %v469 = vadd.f32 %v355, %v468
        %v470 = vpop.f32.mrb[0].mxu0
        %v471 = vadd.f32 %v359, %v470
        %472 = vmatprep.mubr.bf16.mxu0 0
        %473 = vmatmul.mubr.bf16.gmra.mrb[0].mxu0 %v376
        %v474 = vpop.f32.mrb[0].mxu0
        %v475 = vadd.f32 %v355, %v474
        %v476 = vpop.f32.mrb[0].mxu0
        %v477 = vadd.f32 %v359, %v476
        %v478 = vpop.f32.mrb[0].mxu0
        %v479 = vadd.f32 %v355, %v478
        %v480 = vpop.f32.mrb[0].mxu0
        %v481 = vadd.f32 %v359, %v480
        %482 = vmatprep.mubr.bf16.mxu0 0
        %483 = vmatmul.mubr.bf16.gmra.mrb[0].mxu0 %v379
        %v484 = vpop.f32.mrb[0].mxu0
        %v485 = vadd.f32 %v355, %v484
        %v486 = vpop.f32.mrb[0].mxu0
        %v487 = vadd.f32 %v359, %v486
        %v488 = vpop.f32.mrb[0].mxu0
        %v489 = vadd.f32 %v355, %v488
        %v490 = vpop.f32.mrb[0].mxu0
        %v491 = vadd.f32 %v359, %v490
        %492 = vmatprep.mubr.bf16.mxu0 0
        %493 = vmatmul.mubr.bf16.gmra.mrb[0].mxu0 %v382
        %v494 = vpop.f32.mrb[0].mxu0
        %v495 = vadd.f32 %v355, %v494
        %v496 = vpop.f32.mrb[0].mxu0
        %v497 = vadd.f32 %v359, %v496
        %v498 = vpop.f32.mrb[0].mxu0
        %v499 = vadd.f32 %v355, %v498
        %v500 = vpop.f32.mrb[0].mxu0
        %v501 = vadd.f32 %v359, %v500
        %502 = vmatprep.mubr.bf16.mxu0 0
        %503 = vmatmul.mubr.bf16.gmra.mrb[0].mxu0 %v385
        %v504 = vpop.f32.mrb[0].mxu0
        %v505 = vadd.f32 %v355, %v504
        %v506 = vpop.f32.mrb[0].mxu0
        %v507 = vadd.f32 %v359, %v506
        %v508 = vpop.f32.mrb[0].mxu0
        %v509 = vadd.f32 %v355, %v508
        %v510 = vpop.f32.mrb[0].mxu0
        %v511 = vadd.f32 %v359, %v510
        %512 = vmatprep.mubr.bf16.mxu0 0
        %513 = vmatmul.mubr.bf16.gmra.mrb[0].mxu0 %v388
        %v514 = vpop.f32.mrb[0].mxu0
        %v515 = vadd.f32 %v355, %v514
        %v516 = vpop.f32.mrb[0].mxu0
        %v517 = vadd.f32 %v359, %v516
        %v518 = vpop.f32.mrb[0].mxu0
        %v519 = vadd.f32 %v355, %v518
        %v520 = vpop.f32.mrb[0].mxu0
        %v521 = vadd.f32 %v359, %v520
        %522 = vmatprep.mubr.bf16.mxu0 0
        %523 = vmatmul.mubr.bf16.gmra.mrb[0].mxu0 %v391
        %v524 = vpop.f32.mrb[0].mxu0
        %v525 = vadd.f32 %v355, %v524
        %v526 = vpop.f32.mrb[0].mxu0
        %v527 = vadd.f32 %v359, %v526
        %v528 = vpop.f32.mrb[0].mxu0
        %v529 = vadd.f32 %v355, %v528
        %v530 = vpop.f32.mrb[0].mxu0
        %v531 = vadd.f32 %v359, %v530
        %532 = vmatprep.mubr.bf16.mxu0 0
        %533 = vmatmul.mubr.bf16.gmra.mrb[0].mxu0 %v394
        %v534 = vpop.f32.mrb[0].mxu0
        %v535 = vadd.f32 %v355, %v534
        %v536 = vpop.f32.mrb[0].mxu0
        %v537 = vadd.f32 %v359, %v536
        %v538 = vpop.f32.mrb[0].mxu0
        %v539 = vadd.f32 %v355, %v538
        %v540 = vpop.f32.mrb[0].mxu0
        %v541 = vadd.f32 %v359, %v540
        %542 = vmatprep.mubr.bf16.mxu0 0
        %543 = vmatmul.mubr.bf16.gmra.mrb[0].mxu0 %v397
        %v544 = vpop.f32.mrb[0].mxu0
        %v545 = vadd.f32 %v355, %v544
        %v546 = vpop.f32.mrb[0].mxu0
        %v547 = vadd.f32 %v359, %v546
        %v548 = vpop.f32.mrb[0].mxu0
        %v549 = vadd.f32 %v355, %v548
        %v550 = vpop.f32.mrb[0].mxu0
        %v551 = vadd.f32 %v359, %v550
        %552 = vmatprep.mubr.bf16.mxu0 0
        %553 = vmatmul.mubr.bf16.gmra.mrb[0].mxu0 %v400
        %v554 = vpop.f32.mrb[0].mxu0
        %v555 = vadd.f32 %v355, %v554
        %v556 = vpop.f32.mrb[0].mxu0
        %v557 = vadd.f32 %v359, %v556
        %v558 = vpop.f32.mrb[0].mxu0
        %v559 = vadd.f32 %v355, %v558
        %v560 = vpop.f32.mrb[0].mxu0
        %v561 = vadd.f32 %v359, %v560
        %562 = vmatprep.mubr.bf16.mxu0 0
        %563 = vmatmul.mubr.bf16.gmra.mrb[0].mxu0 %v403
        %v564 = vpop.f32.mrb[0].mxu0
        %v565 = vadd.f32 %v355, %v564
        %v566 = vpop.f32.mrb[0].mxu0
        %v567 = vadd.f32 %v359, %v566
        %v568 = vpop.f32.mrb[0].mxu0
        %v569 = vadd.f32 %v355, %v568
        %v570 = vpop.f32.mrb[0].mxu0
        %v571 = vadd.f32 %v359, %v570
        %572 = vmatprep.mubr.bf16.mxu0 0
        %573 = vmatmul.mubr.bf16.gmra.mrb[0].mxu0 %v406
        %v574 = vpop.f32.mrb[0].mxu0
        %v575 = vadd.f32 %v355, %v574
        %v576 = vpop.f32.mrb[0].mxu0
        %v577 = vadd.f32 %v359, %v576
        %v578 = vpop.f32.mrb[0].mxu0
        %v579 = vadd.f32 %v355, %v578
        %v580 = vpop.f32.mrb[0].mxu0
        %v581 = vadd.f32 %v359, %v580
        %582 = vmatprep.mubr.bf16.mxu0 0
        %583 = vmatmul.mubr.bf16.gmra.mrb[0].mxu0 %v409
        %v584 = vpop.f32.mrb[0].mxu0
        %v585 = vadd.f32 %v355, %v584
        %v586 = vpop.f32.mrb[0].mxu0
        %v587 = vadd.f32 %v359, %v586
        %v588 = vpop.f32.mrb[0].mxu0
        %v589 = vadd.f32 %v355, %v588
        %v590 = vpop.f32.mrb[0].mxu0
        %v591 = vadd.f32 %v359, %v590
        %592 = vmatprep.mubr.bf16.mxu0 0
        %593 = vmatmul.mubr.bf16.gmra.mrb[0].mxu0 %v412
        %v594 = vpop.f32.mrb[0].mxu0
        %v595 = vadd.f32 %v355, %v594
        %v596 = vpop.f32.mrb[0].mxu0
        %v597 = vadd.f32 %v359, %v596
        %v598 = vpop.f32.mrb[0].mxu0
        %v599 = vadd.f32 %v355, %v598
        %v600 = vpop.f32.mrb[0].mxu0
        %v601 = vadd.f32 %v359, %v600
        %602 = vmatprep.mubr.bf16.mxu0 0
        %603 = vmatmul.mubr.bf16.gmra.mrb[0].mxu0 %v415
        %v604 = vpop.f32.mrb[0].mxu0
        %v605 = vadd.f32 %v355, %v604
        %v606 = vpop.f32.mrb[0].mxu0
        %v607 = vadd.f32 %v359, %v606
        %v608 = vpop.f32.mrb[0].mxu0
        %v609 = vadd.f32 %v355, %v608
        %v610 = vpop.f32.mrb[0].mxu0
        %v611 = vadd.f32 %v359, %v610
        %612 = vmatprep.mubr.bf16.mxu0 0
        %613 = vmatmul.mubr.bf16.gmra.mrb[0].mxu0 %v418
        %v614 = vpop.f32.mrb[0].mxu0
        %v615 = vadd.f32 %v355, %v614
        %v616 = vpop.f32.mrb[0].mxu0
        %v617 = vadd.f32 %v359, %v616
        %v618 = vpop.f32.mrb[0].mxu0
        %v619 = vadd.f32 %v355, %v618
        %v620 = vpop.f32.mrb[0].mxu0
        %v621 = vadd.f32 %v359, %v620
        %622 = vdwg.mxu0
        %v623 = vmax.f32 %v465, 0.0
        %v624 = vmax.f32 %v467, 0.0
        %v625 = vmax.f32 %v469, 0.0
        %v626 = vmax.f32 %v471, 0.0
        %v627 = vmax.f32 %v475, 0.0
        %v628 = vmax.f32 %v477, 0.0
        %v629 = vmax.f32 %v479, 0.0
        %v630 = vmax.f32 %v481, 0.0
        %v631 = vmax.f32 %v485, 0.0
        %v632 = vmax.f32 %v487, 0.0
        %v633 = vmax.f32 %v489, 0.0
        %v634 = vmax.f32 %v491, 0.0
        %v635 = vmax.f32 %v495, 0.0
        %v636 = vmax.f32 %v497, 0.0
        %v637 = vmax.f32 %v499, 0.0
        %v638 = vmax.f32 %v501, 0.0
        %v639 = vmax.f32 %v505, 0.0
        %v640 = vmax.f32 %v507, 0.0
        %v641 = vmax.f32 %v509, 0.0
        %v642 = vmax.f32 %v511, 0.0
        %v643 = vmax.f32 %v515, 0.0
        %v644 = vmax.f32 %v517, 0.0
        %v645 = vmax.f32 %v519, 0.0
        %v646 = vmax.f32 %v521, 0.0
        %v647 = vmax.f32 %v525, 0.0
        %v648 = vmax.f32 %v527, 0.0
        %v649 = vmax.f32 %v529, 0.0
        %v650 = vmax.f32 %v531, 0.0
        %v651 = vmax.f32 %v535, 0.0
        %v652 = vmax.f32 %v537, 0.0
        %v653 = vmax.f32 %v539, 0.0
        %v654 = vmax.f32 %v541, 0.0
        %v655 = vmax.f32 %v545, 0.0
        %v656 = vmax.f32 %v547, 0.0
        %v657 = vmax.f32 %v549, 0.0
        %v658 = vmax.f32 %v551, 0.0
        %v659 = vmax.f32 %v555, 0.0
        %v660 = vmax.f32 %v557, 0.0
        %v661 = vmax.f32 %v559, 0.0
        %v662 = vmax.f32 %v561, 0.0
        %v663 = vmax.f32 %v565, 0.0
        %v664 = vmax.f32 %v567, 0.0
        %v665 = vmax.f32 %v569, 0.0
        %v666 = vmax.f32 %v571, 0.0
        %v667 = vmax.f32 %v575, 0.0
        %v668 = vmax.f32 %v577, 0.0
        %v669 = vmax.f32 %v579, 0.0
        %v670 = vmax.f32 %v581, 0.0
        %v671 = vmax.f32 %v585, 0.0
        %v672 = vmax.f32 %v587, 0.0
        %v673 = vmax.f32 %v589, 0.0
        %v674 = vmax.f32 %v591, 0.0
        %v675 = vmax.f32 %v595, 0.0
        %v676 = vmax.f32 %v597, 0.0
        %v677 = vmax.f32 %v599, 0.0
        %v678 = vmax.f32 %v601, 0.0
        %v679 = vmax.f32 %v605, 0.0
        %v680 = vmax.f32 %v607, 0.0
        %v681 = vmax.f32 %v609, 0.0
        %v682 = vmax.f32 %v611, 0.0
        %v683 = vmax.f32 %v615, 0.0
        %v684 = vmax.f32 %v617, 0.0
        %v685 = vmax.f32 %v619, 0.0
        %v686 = vmax.f32 %v621, 0.0
        %v687 = vpack.c.bf16 %v625, %v623
        %v688 = vpack.c.bf16 %v626, %v624
        %v689 = vpack.c.bf16 %v629, %v627
        %v690 = vpack.c.bf16 %v630, %v628
        %v691 = vpack.c.bf16 %v633, %v631
        %v692 = vpack.c.bf16 %v634, %v632
        %v693 = vpack.c.bf16 %v637, %v635
        %v694 = vpack.c.bf16 %v638, %v636
        %v695 = vpack.c.bf16 %v641, %v639
        %v696 = vpack.c.bf16 %v642, %v640
        %v697 = vpack.c.bf16 %v645, %v643
        %v698 = vpack.c.bf16 %v646, %v644
        %v699 = vpack.c.bf16 %v649, %v647
        %v700 = vpack.c.bf16 %v650, %v648
        %v701 = vpack.c.bf16 %v653, %v651
        %v702 = vpack.c.bf16 %v654, %v652
        %v703 = vpack.c.bf16 %v657, %v655
        %v704 = vpack.c.bf16 %v658, %v656
        %v705 = vpack.c.bf16 %v661, %v659
        %v706 = vpack.c.bf16 %v662, %v660
        %v707 = vpack.c.bf16 %v665, %v663
        %v708 = vpack.c.bf16 %v666, %v664
        %v709 = vpack.c.bf16 %v669, %v667
        %v710 = vpack.c.bf16 %v670, %v668
        %v711 = vpack.c.bf16 %v673, %v671
        %v712 = vpack.c.bf16 %v674, %v672
        %v713 = vpack.c.bf16 %v677, %v675
        %v714 = vpack.c.bf16 %v678, %v676
        %v715 = vpack.c.bf16 %v681, %v679
        %v716 = vpack.c.bf16 %v682, %v680
        %v717 = vpack.c.bf16 %v685, %v683
        %v718 = vpack.c.bf16 %v686, %v684
        %v719 = vld [vmem:[%s3] sm:$0xff]
        %v720 = vld [vmem:[%s3 + $0x8] sm:$0xff]
        %v721 = vld [vmem:[%s3 + $0x10] sm:$0xff]
        %v722 = vld [vmem:[%s3 + $0x18] sm:$0xff]
        %v723 = vld [vmem:[%s3 + $0x20] sm:$0xff]
        %v724 = vld [vmem:[%s3 + $0x28] sm:$0xff]
        %v725 = vld [vmem:[%s3 + $0x30] sm:$0xff]
        %v726 = vld [vmem:[%s3 + $0x38] sm:$0xff]
        %v727 = vld [vmem:[%s3 + $0x40] sm:$0xff]
        %v728 = vld [vmem:[%s3 + $0x48] sm:$0xff]
        %v729 = vld [vmem:[%s3 + $0x50] sm:$0xff]
        %v730 = vld [vmem:[%s3 + $0x58] sm:$0xff]
        %v731 = vld [vmem:[%s3 + $0x60] sm:$0xff]
        %v732 = vld [vmem:[%s3 + $0x68] sm:$0xff]
        %v733 = vld [vmem:[%s3 + $0x70] sm:$0xff]
        %v734 = vld [vmem:[%s3 + $0x78] sm:$0xff]
        %v735 = vld [vmem:[%s3 + $0x80] sm:$0xff]
        %v736 = vld [vmem:[%s3 + $0x88] sm:$0xff]
        %v737 = vld [vmem:[%s3 + $0x90] sm:$0xff]
        %v738 = vld [vmem:[%s3 + $0x98] sm:$0xff]
        %v739 = vld [vmem:[%s3 + $0xa0] sm:$0xff]
        %v740 = vld [vmem:[%s3 + $0xa8] sm:$0xff]
        %v741 = vld [vmem:[%s3 + $0xb0] sm:$0xff]
        %v742 = vld [vmem:[%s3 + $0xb8] sm:$0xff]
        %v743 = vld [vmem:[%s3 + $0xc0] sm:$0xff]
        %v744 = vld [vmem:[%s3 + $0xc8] sm:$0xff]
        %v745 = vld [vmem:[%s3 + $0xd0] sm:$0xff]
        %v746 = vld [vmem:[%s3 + $0xd8] sm:$0xff]
        %v747 = vld [vmem:[%s3 + $0xe0] sm:$0xff]
        %v748 = vld [vmem:[%s3 + $0xe8] sm:$0xff]
        %v749 = vld [vmem:[%s3 + $0xf0] sm:$0xff]
        %v750 = vld [vmem:[%s3 + $0xf8] sm:$0xff]
        %v751 = vld [vmem:[%s4] sm:$0x3]
        %v753 = vlaneseq
        %v754 = vshrl.u32 %v753, 7
        %v755 = vsub.s32 0, %v754
        %v756 = vrot.slane %v751, %v755
        %v757 = vlaneseq
        %v758 = vshrl.u32 %v757, 7
        %v759 = vsub.s32 1, %v758
        %v760 = vrot.slane %v751, %v759
        %v795 = vunpack.c.l.b16 %v719
        %v796 = vunpack.c.h.b16 %v719
        %v797 = vunpack.c.l.b16 %v720
        %v798 = vunpack.c.h.b16 %v720
        %v799 = vunpack.c.l.b16 %v721
        %v800 = vunpack.c.h.b16 %v721
        %v801 = vunpack.c.l.b16 %v722
        %v802 = vunpack.c.h.b16 %v722
        %v803 = vunpack.c.l.b16 %v723
        %v804 = vunpack.c.h.b16 %v723
        %v805 = vunpack.c.l.b16 %v724
        %v806 = vunpack.c.h.b16 %v724
        %v807 = vunpack.c.l.b16 %v725
        %v808 = vunpack.c.h.b16 %v725
        %v809 = vunpack.c.l.b16 %v726
        %v810 = vunpack.c.h.b16 %v726
        %v811 = vunpack.c.l.b16 %v727
        %v812 = vunpack.c.h.b16 %v727
        %v813 = vunpack.c.l.b16 %v728
        %v814 = vunpack.c.h.b16 %v728
        %v815 = vunpack.c.l.b16 %v729
        %v816 = vunpack.c.h.b16 %v729
        %v817 = vunpack.c.l.b16 %v730
        %v818 = vunpack.c.h.b16 %v730
        %v819 = vunpack.c.l.b16 %v731
        %v820 = vunpack.c.h.b16 %v731
        %v821 = vunpack.c.l.b16 %v732
        %v822 = vunpack.c.h.b16 %v732
        %v823 = vunpack.c.l.b16 %v733
        %v824 = vunpack.c.h.b16 %v733
        %v825 = vunpack.c.l.b16 %v734
        %v826 = vunpack.c.h.b16 %v734
        %v827 = vunpack.c.l.b16 %v735
        %v828 = vunpack.c.h.b16 %v735
        %v829 = vunpack.c.l.b16 %v736
        %v830 = vunpack.c.h.b16 %v736
        %v831 = vunpack.c.l.b16 %v737
        %v832 = vunpack.c.h.b16 %v737
        %v833 = vunpack.c.l.b16 %v738
        %v834 = vunpack.c.h.b16 %v738
        %v835 = vunpack.c.l.b16 %v739
        %v836 = vunpack.c.h.b16 %v739
        %v837 = vunpack.c.l.b16 %v740
        %v838 = vunpack.c.h.b16 %v740
        %v839 = vunpack.c.l.b16 %v741
        %v840 = vunpack.c.h.b16 %v741
        %v841 = vunpack.c.l.b16 %v742
        %v842 = vunpack.c.h.b16 %v742
        %v843 = vunpack.c.l.b16 %v743
        %v844 = vunpack.c.h.b16 %v743
        %v845 = vunpack.c.l.b16 %v744
        %v846 = vunpack.c.h.b16 %v744
        %v847 = vunpack.c.l.b16 %v745
        %v848 = vunpack.c.h.b16 %v745
        %v849 = vunpack.c.l.b16 %v746
        %v850 = vunpack.c.h.b16 %v746
        %v851 = vunpack.c.l.b16 %v747
        %v852 = vunpack.c.h.b16 %v747
        %v853 = vunpack.c.l.b16 %v748
        %v854 = vunpack.c.h.b16 %v748
        %v855 = vunpack.c.l.b16 %v749
        %v856 = vunpack.c.h.b16 %v749
        %v857 = vunpack.c.l.b16 %v750
        %v858 = vunpack.c.h.b16 %v750
        %v859 = vpack.c.b16 %v797, %v795
        %v860 = vpack.c.b16 %v798, %v796
        %v861 = vpack.c.b16 %v801, %v799
        %v862 = vpack.c.b16 %v802, %v800
        %v863 = vpack.c.b16 %v805, %v803
        %v864 = vpack.c.b16 %v806, %v804
        %v865 = vpack.c.b16 %v809, %v807
        %v866 = vpack.c.b16 %v810, %v808
        %v867 = vpack.c.b16 %v813, %v811
        %v868 = vpack.c.b16 %v814, %v812
        %v869 = vpack.c.b16 %v817, %v815
        %v870 = vpack.c.b16 %v818, %v816
        %v871 = vpack.c.b16 %v821, %v819
        %v872 = vpack.c.b16 %v822, %v820
        %v873 = vpack.c.b16 %v825, %v823
        %v874 = vpack.c.b16 %v826, %v824
        %v875 = vpack.c.b16 %v829, %v827
        %v876 = vpack.c.b16 %v830, %v828
        %v877 = vpack.c.b16 %v833, %v831
        %v878 = vpack.c.b16 %v834, %v832
        %v879 = vpack.c.b16 %v837, %v835
        %v880 = vpack.c.b16 %v838, %v836
        %v881 = vpack.c.b16 %v841, %v839
        %v882 = vpack.c.b16 %v842, %v840
        %v883 = vpack.c.b16 %v845, %v843
        %v884 = vpack.c.b16 %v846, %v844
        %v885 = vpack.c.b16 %v849, %v847
        %v886 = vpack.c.b16 %v850, %v848
        %v887 = vpack.c.b16 %v853, %v851
        %v888 = vpack.c.b16 %v854, %v852
        %v889 = vpack.c.b16 %v857, %v855
        %v890 = vpack.c.b16 %v858, %v856
        %923 = vmatprep.subr.bf16.mxu0 %v860
        %924 = vmatpush1.bf16.msra.mxu0 %v859
        %925 = vmatprep.subr.bf16.mxu0 %v862
        %926 = vmatpush1.bf16.msra.mxu0 %v861
        %927 = vmatprep.subr.bf16.mxu0 %v864
        %928 = vmatpush1.bf16.msra.mxu0 %v863
        %929 = vmatprep.subr.bf16.mxu0 %v866
        %930 = vmatpush1.bf16.msra.mxu0 %v865
        %931 = vmatprep.subr.bf16.mxu0 %v868
        %932 = vmatpush1.bf16.msra.mxu0 %v867
        %933 = vmatprep.subr.bf16.mxu0 %v870
        %934 = vmatpush1.bf16.msra.mxu0 %v869
        %935 = vmatprep.subr.bf16.mxu0 %v872
        %936 = vmatpush1.bf16.msra.mxu0 %v871
        %937 = vmatprep.subr.bf16.mxu0 %v874
        %938 = vmatpush1.bf16.msra.mxu0 %v873
        %939 = vmatprep.subr.bf16.mxu0 %v876
        %940 = vmatpush1.bf16.msra.mxu0 %v875
        %941 = vmatprep.subr.bf16.mxu0 %v878
        %942 = vmatpush1.bf16.msra.mxu0 %v877
        %943 = vmatprep.subr.bf16.mxu0 %v880
        %944 = vmatpush1.bf16.msra.mxu0 %v879
        %945 = vmatprep.subr.bf16.mxu0 %v882
        %946 = vmatpush1.bf16.msra.mxu0 %v881
        %947 = vmatprep.subr.bf16.mxu0 %v884
        %948 = vmatpush1.bf16.msra.mxu0 %v883
        %949 = vmatprep.subr.bf16.mxu0 %v886
        %950 = vmatpush1.bf16.msra.mxu0 %v885
        %951 = vmatprep.subr.bf16.mxu0 %v888
        %952 = vmatpush1.bf16.msra.mxu0 %v887
        %953 = vmatprep.subr.bf16.mxu0 %v890
        %954 = vmatpush1.bf16.msra.mxu0 %v889
        %955 = vmatprep.mubr.bf16.mxu0 %v688
        %956 = vmatmul.mubr.bf16.gmra.mrb[0].mxu0 %v687
        %v957 = vpop.f32.mrb[0].mxu0
        %v958 = vadd.f32 %v756, %v957
        %v959 = vpop.f32.mrb[0].mxu0
        %v960 = vadd.f32 %v760, %v959
        %v961 = vpop.f32.mrb[0].mxu0
        %v962 = vadd.f32 %v756, %v961
        %v963 = vpop.f32.mrb[0].mxu0
        %v964 = vadd.f32 %v760, %v963
        %965 = vmatprep.mubr.bf16.mxu0 %v690
        %966 = vmatmul.mubr.bf16.gmra.mrb[0].mxu0 %v689
        %v967 = vpop.f32.mrb[0].mxu0
        %v968 = vadd.f32 %v756, %v967
        %v969 = vpop.f32.mrb[0].mxu0
        %v970 = vadd.f32 %v760, %v969
        %v971 = vpop.f32.mrb[0].mxu0
        %v972 = vadd.f32 %v756, %v971
        %v973 = vpop.f32.mrb[0].mxu0
        %v974 = vadd.f32 %v760, %v973
        %975 = vmatprep.mubr.bf16.mxu0 %v692
        %976 = vmatmul.mubr.bf16.gmra.mrb[0].mxu0 %v691
        %v977 = vpop.f32.mrb[0].mxu0
        %v978 = vadd.f32 %v756, %v977
        %v979 = vpop.f32.mrb[0].mxu0
        %v980 = vadd.f32 %v760, %v979
        %v981 = vpop.f32.mrb[0].mxu0
        %v982 = vadd.f32 %v756, %v981
        %v983 = vpop.f32.mrb[0].mxu0
        %v984 = vadd.f32 %v760, %v983
        %985 = vmatprep.mubr.bf16.mxu0 %v694
        %986 = vmatmul.mubr.bf16.gmra.mrb[0].mxu0 %v693
        %v987 = vpop.f32.mrb[0].mxu0
        %v988 = vadd.f32 %v756, %v987
        %v989 = vpop.f32.mrb[0].mxu0
        %v990 = vadd.f32 %v760, %v989
        %v991 = vpop.f32.mrb[0].mxu0
        %v992 = vadd.f32 %v756, %v991
        %v993 = vpop.f32.mrb[0].mxu0
        %v994 = vadd.f32 %v760, %v993
        %995 = vmatprep.mubr.bf16.mxu0 %v696
        %996 = vmatmul.mubr.bf16.gmra.mrb[0].mxu0 %v695
        %v997 = vpop.f32.mrb[0].mxu0
        %v998 = vadd.f32 %v756, %v997
        %v999 = vpop.f32.mrb[0].mxu0
        %v1000 = vadd.f32 %v760, %v999
        %v1001 = vpop.f32.mrb[0].mxu0
        %v1002 = vadd.f32 %v756, %v1001
        %v1003 = vpop.f32.mrb[0].mxu0
        %v1004 = vadd.f32 %v760, %v1003
        %1005 = vmatprep.mubr.bf16.mxu0 %v698
        %1006 = vmatmul.mubr.bf16.gmra.mrb[0].mxu0 %v697
        %v1007 = vpop.f32.mrb[0].mxu0
        %v1008 = vadd.f32 %v756, %v1007
        %v1009 = vpop.f32.mrb[0].mxu0
        %v1010 = vadd.f32 %v760, %v1009
        %v1011 = vpop.f32.mrb[0].mxu0
        %v1012 = vadd.f32 %v756, %v1011
        %v1013 = vpop.f32.mrb[0].mxu0
        %v1014 = vadd.f32 %v760, %v1013
        %1015 = vmatprep.mubr.bf16.mxu0 %v700
        %1016 = vmatmul.mubr.bf16.gmra.mrb[0].mxu0 %v699
        %v1017 = vpop.f32.mrb[0].mxu0
        %v1018 = vadd.f32 %v756, %v1017
        %v1019 = vpop.f32.mrb[0].mxu0
        %v1020 = vadd.f32 %v760, %v1019
        %v1021 = vpop.f32.mrb[0].mxu0
        %v1022 = vadd.f32 %v756, %v1021
        %v1023 = vpop.f32.mrb[0].mxu0
        %v1024 = vadd.f32 %v760, %v1023
        %1025 = vmatprep.mubr.bf16.mxu0 %v702
        %1026 = vmatmul.mubr.bf16.gmra.mrb[0].mxu0 %v701
        %v1027 = vpop.f32.mrb[0].mxu0
        %v1028 = vadd.f32 %v756, %v1027
        %v1029 = vpop.f32.mrb[0].mxu0
        %v1030 = vadd.f32 %v760, %v1029
        %v1031 = vpop.f32.mrb[0].mxu0
        %v1032 = vadd.f32 %v756, %v1031
        %v1033 = vpop.f32.mrb[0].mxu0
        %v1034 = vadd.f32 %v760, %v1033
        %1035 = vmatprep.mubr.bf16.mxu0 %v704
        %1036 = vmatmul.mubr.bf16.gmra.mrb[0].mxu0 %v703
        %v1037 = vpop.f32.mrb[0].mxu0
        %v1038 = vadd.f32 %v756, %v1037
        %v1039 = vpop.f32.mrb[0].mxu0
        %v1040 = vadd.f32 %v760, %v1039
        %v1041 = vpop.f32.mrb[0].mxu0
        %v1042 = vadd.f32 %v756, %v1041
        %v1043 = vpop.f32.mrb[0].mxu0
        %v1044 = vadd.f32 %v760, %v1043
        %1045 = vmatprep.mubr.bf16.mxu0 %v706
        %1046 = vmatmul.mubr.bf16.gmra.mrb[0].mxu0 %v705
        %v1047 = vpop.f32.mrb[0].mxu0
        %v1048 = vadd.f32 %v756, %v1047
        %v1049 = vpop.f32.mrb[0].mxu0
        %v1050 = vadd.f32 %v760, %v1049
        %v1051 = vpop.f32.mrb[0].mxu0
        %v1052 = vadd.f32 %v756, %v1051
        %v1053 = vpop.f32.mrb[0].mxu0
        %v1054 = vadd.f32 %v760, %v1053
        %1055 = vmatprep.mubr.bf16.mxu0 %v708
        %1056 = vmatmul.mubr.bf16.gmra.mrb[0].mxu0 %v707
        %v1057 = vpop.f32.mrb[0].mxu0
        %v1058 = vadd.f32 %v756, %v1057
        %v1059 = vpop.f32.mrb[0].mxu0
        %v1060 = vadd.f32 %v760, %v1059
        %v1061 = vpop.f32.mrb[0].mxu0
        %v1062 = vadd.f32 %v756, %v1061
        %v1063 = vpop.f32.mrb[0].mxu0
        %v1064 = vadd.f32 %v760, %v1063
        %1065 = vmatprep.mubr.bf16.mxu0 %v710
        %1066 = vmatmul.mubr.bf16.gmra.mrb[0].mxu0 %v709
        %v1067 = vpop.f32.mrb[0].mxu0
        %v1068 = vadd.f32 %v756, %v1067
        %v1069 = vpop.f32.mrb[0].mxu0
        %v1070 = vadd.f32 %v760, %v1069
        %v1071 = vpop.f32.mrb[0].mxu0
        %v1072 = vadd.f32 %v756, %v1071
        %v1073 = vpop.f32.mrb[0].mxu0
        %v1074 = vadd.f32 %v760, %v1073
        %1075 = vmatprep.mubr.bf16.mxu0 %v712
        %1076 = vmatmul.mubr.bf16.gmra.mrb[0].mxu0 %v711
        %v1077 = vpop.f32.mrb[0].mxu0
        %v1078 = vadd.f32 %v756, %v1077
        %v1079 = vpop.f32.mrb[0].mxu0
        %v1080 = vadd.f32 %v760, %v1079
        %v1081 = vpop.f32.mrb[0].mxu0
        %v1082 = vadd.f32 %v756, %v1081
        %v1083 = vpop.f32.mrb[0].mxu0
        %v1084 = vadd.f32 %v760, %v1083
        %1085 = vmatprep.mubr.bf16.mxu0 %v714
        %1086 = vmatmul.mubr.bf16.gmra.mrb[0].mxu0 %v713
        %v1087 = vpop.f32.mrb[0].mxu0
        %v1088 = vadd.f32 %v756, %v1087
        %v1089 = vpop.f32.mrb[0].mxu0
        %v1090 = vadd.f32 %v760, %v1089
        %v1091 = vpop.f32.mrb[0].mxu0
        %v1092 = vadd.f32 %v756, %v1091
        %v1093 = vpop.f32.mrb[0].mxu0
        %v1094 = vadd.f32 %v760, %v1093
        %1095 = vmatprep.mubr.bf16.mxu0 %v716
        %1096 = vmatmul.mubr.bf16.gmra.mrb[0].mxu0 %v715
        %v1097 = vpop.f32.mrb[0].mxu0
        %v1098 = vadd.f32 %v756, %v1097
        %v1099 = vpop.f32.mrb[0].mxu0
        %v1100 = vadd.f32 %v760, %v1099
        %v1101 = vpop.f32.mrb[0].mxu0
        %v1102 = vadd.f32 %v756, %v1101
        %v1103 = vpop.f32.mrb[0].mxu0
        %v1104 = vadd.f32 %v760, %v1103
        %1105 = vmatprep.mubr.bf16.mxu0 %v718
        %1106 = vmatmul.mubr.bf16.gmra.mrb[0].mxu0 %v717
        %v1107 = vpop.f32.mrb[0].mxu0
        %v1108 = vadd.f32 %v756, %v1107
        %v1109 = vpop.f32.mrb[0].mxu0
        %v1110 = vadd.f32 %v760, %v1109
        %v1111 = vpop.f32.mrb[0].mxu0
        %v1112 = vadd.f32 %v756, %v1111
        %v1113 = vpop.f32.mrb[0].mxu0
        %v1114 = vadd.f32 %v760, %v1113
        %1115 = vdwg.mxu0
        %v1116 = vmax.f32 %v958, 0.0
        %v1117 = vmax.f32 %v960, 0.0
        %v1118 = vmax.f32 %v962, 0.0
        %v1119 = vmax.f32 %v964, 0.0
        %v1120 = vmax.f32 %v968, 0.0
        %v1121 = vmax.f32 %v970, 0.0
        %v1122 = vmax.f32 %v972, 0.0
        %v1123 = vmax.f32 %v974, 0.0
        %v1124 = vmax.f32 %v978, 0.0
        %v1125 = vmax.f32 %v980, 0.0
        %v1126 = vmax.f32 %v982, 0.0
        %v1127 = vmax.f32 %v984, 0.0
        %v1128 = vmax.f32 %v988, 0.0
        %v1129 = vmax.f32 %v990, 0.0
        %v1130 = vmax.f32 %v992, 0.0
        %v1131 = vmax.f32 %v994, 0.0
        %v1132 = vmax.f32 %v998, 0.0
        %v1133 = vmax.f32 %v1000, 0.0
        %v1134 = vmax.f32 %v1002, 0.0
        %v1135 = vmax.f32 %v1004, 0.0
        %v1136 = vmax.f32 %v1008, 0.0
        %v1137 = vmax.f32 %v1010, 0.0
        %v1138 = vmax.f32 %v1012, 0.0
        %v1139 = vmax.f32 %v1014, 0.0
        %v1140 = vmax.f32 %v1018, 0.0
        %v1141 = vmax.f32 %v1020, 0.0
        %v1142 = vmax.f32 %v1022, 0.0
        %v1143 = vmax.f32 %v1024, 0.0
        %v1144 = vmax.f32 %v1028, 0.0
        %v1145 = vmax.f32 %v1030, 0.0
        %v1146 = vmax.f32 %v1032, 0.0
        %v1147 = vmax.f32 %v1034, 0.0
        %v1148 = vmax.f32 %v1038, 0.0
        %v1149 = vmax.f32 %v1040, 0.0
        %v1150 = vmax.f32 %v1042, 0.0
        %v1151 = vmax.f32 %v1044, 0.0
        %v1152 = vmax.f32 %v1048, 0.0
        %v1153 = vmax.f32 %v1050, 0.0
        %v1154 = vmax.f32 %v1052, 0.0
        %v1155 = vmax.f32 %v1054, 0.0
        %v1156 = vmax.f32 %v1058, 0.0
        %v1157 = vmax.f32 %v1060, 0.0
        %v1158 = vmax.f32 %v1062, 0.0
        %v1159 = vmax.f32 %v1064, 0.0
        %v1160 = vmax.f32 %v1068, 0.0
        %v1161 = vmax.f32 %v1070, 0.0
        %v1162 = vmax.f32 %v1072, 0.0
        %v1163 = vmax.f32 %v1074, 0.0
        %v1164 = vmax.f32 %v1078, 0.0
        %v1165 = vmax.f32 %v1080, 0.0
        %v1166 = vmax.f32 %v1082, 0.0
        %v1167 = vmax.f32 %v1084, 0.0
        %v1168 = vmax.f32 %v1088, 0.0
        %v1169 = vmax.f32 %v1090, 0.0
        %v1170 = vmax.f32 %v1092, 0.0
        %v1171 = vmax.f32 %v1094, 0.0
        %v1172 = vmax.f32 %v1098, 0.0
        %v1173 = vmax.f32 %v1100, 0.0
        %v1174 = vmax.f32 %v1102, 0.0
        %v1175 = vmax.f32 %v1104, 0.0
        %v1176 = vmax.f32 %v1108, 0.0
        %v1177 = vmax.f32 %v1110, 0.0
        %v1178 = vmax.f32 %v1112, 0.0
        %v1179 = vmax.f32 %v1114, 0.0
        %v1180 = vpack.c.bf16 %v1118, %v1116
        %v1181 = vpack.c.bf16 %v1119, %v1117
        %v1182 = vpack.c.bf16 %v1122, %v1120
        %v1183 = vpack.c.bf16 %v1123, %v1121
        %v1184 = vpack.c.bf16 %v1126, %v1124
        %v1185 = vpack.c.bf16 %v1127, %v1125
        %v1186 = vpack.c.bf16 %v1130, %v1128
        %v1187 = vpack.c.bf16 %v1131, %v1129
        %v1188 = vpack.c.bf16 %v1134, %v1132
        %v1189 = vpack.c.bf16 %v1135, %v1133
        %v1190 = vpack.c.bf16 %v1138, %v1136
        %v1191 = vpack.c.bf16 %v1139, %v1137
        %v1192 = vpack.c.bf16 %v1142, %v1140
        %v1193 = vpack.c.bf16 %v1143, %v1141
        %v1194 = vpack.c.bf16 %v1146, %v1144
        %v1195 = vpack.c.bf16 %v1147, %v1145
        %v1196 = vpack.c.bf16 %v1150, %v1148
        %v1197 = vpack.c.bf16 %v1151, %v1149
        %v1198 = vpack.c.bf16 %v1154, %v1152
        %v1199 = vpack.c.bf16 %v1155, %v1153
        %v1200 = vpack.c.bf16 %v1158, %v1156
        %v1201 = vpack.c.bf16 %v1159, %v1157
        %v1202 = vpack.c.bf16 %v1162, %v1160
        %v1203 = vpack.c.bf16 %v1163, %v1161
        %v1204 = vpack.c.bf16 %v1166, %v1164
        %v1205 = vpack.c.bf16 %v1167, %v1165
        %v1206 = vpack.c.bf16 %v1170, %v1168
        %v1207 = vpack.c.bf16 %v1171, %v1169
        %v1208 = vpack.c.bf16 %v1174, %v1172
        %v1209 = vpack.c.bf16 %v1175, %v1173
        %v1210 = vpack.c.bf16 %v1178, %v1176
        %v1211 = vpack.c.bf16 %v1179, %v1177
        %v1212 = vld [vmem:[%s5] sm:$0xf]
        %v1213 = vld [vmem:[%s5 + $0x4] sm:$0xf]
        %v1214 = vld [vmem:[%s5 + $0x8] sm:$0xf]
        %v1215 = vld [vmem:[%s5 + $0xc] sm:$0xf]
        %v1216 = vld [vmem:[%s5 + $0x10] sm:$0xf]
        %v1217 = vld [vmem:[%s5 + $0x14] sm:$0xf]
        %v1218 = vld [vmem:[%s5 + $0x18] sm:$0xf]
        %v1219 = vld [vmem:[%s5 + $0x1c] sm:$0xf]
        %v1220 = vld [vmem:[%s5 + $0x20] sm:$0xf]
        %v1221 = vld [vmem:[%s5 + $0x24] sm:$0xf]
        %v1222 = vld [vmem:[%s5 + $0x28] sm:$0xf]
        %v1223 = vld [vmem:[%s5 + $0x2c] sm:$0xf]
        %v1224 = vld [vmem:[%s5 + $0x30] sm:$0xf]
        %v1225 = vld [vmem:[%s5 + $0x34] sm:$0xf]
        %v1226 = vld [vmem:[%s5 + $0x38] sm:$0xf]
        %v1227 = vld [vmem:[%s5 + $0x3c] sm:$0xf]
        %v1228 = vld [vmem:[%s5 + $0x40] sm:$0xf]
        %v1229 = vld [vmem:[%s5 + $0x44] sm:$0xf]
        %v1230 = vld [vmem:[%s5 + $0x48] sm:$0xf]
        %v1231 = vld [vmem:[%s5 + $0x4c] sm:$0xf]
        %v1232 = vld [vmem:[%s5 + $0x50] sm:$0xf]
        %v1233 = vld [vmem:[%s5 + $0x54] sm:$0xf]
        %v1234 = vld [vmem:[%s5 + $0x58] sm:$0xf]
        %v1235 = vld [vmem:[%s5 + $0x5c] sm:$0xf]
        %v1236 = vld [vmem:[%s5 + $0x60] sm:$0xf]
        %v1237 = vld [vmem:[%s5 + $0x64] sm:$0xf]
        %v1238 = vld [vmem:[%s5 + $0x68] sm:$0xf]
        %v1239 = vld [vmem:[%s5 + $0x6c] sm:$0xf]
        %v1240 = vld [vmem:[%s5 + $0x70] sm:$0xf]
        %v1241 = vld [vmem:[%s5 + $0x74] sm:$0xf]
        %v1242 = vld [vmem:[%s5 + $0x78] sm:$0xf]
        %v1243 = vld [vmem:[%s5 + $0x7c] sm:$0xf]
        %v1244 = vld [vmem:[%s6] sm:$0x1]
        %v1246 = vlaneseq
        %v1247 = vshrl.u32 %v1246, 7
        %v1248 = vsub.s32 0, %v1247
        %v1249 = vrot.slane %v1244, %v1248
        %v1283 = vunpack.c.l.b16 %v1212
        %v1284 = vunpack.c.l.b16 %v1213
        %v1285 = vunpack.c.l.b16 %v1214
        %v1286 = vunpack.c.l.b16 %v1215
        %v1287 = vunpack.c.l.b16 %v1216
        %v1288 = vunpack.c.l.b16 %v1217
        %v1289 = vunpack.c.l.b16 %v1218
        %v1290 = vunpack.c.l.b16 %v1219
        %v1291 = vunpack.c.l.b16 %v1220
        %v1292 = vunpack.c.l.b16 %v1221
        %v1293 = vunpack.c.l.b16 %v1222
        %v1294 = vunpack.c.l.b16 %v1223
        %v1295 = vunpack.c.l.b16 %v1224
        %v1296 = vunpack.c.l.b16 %v1225
        %v1297 = vunpack.c.l.b16 %v1226
        %v1298 = vunpack.c.l.b16 %v1227
        %v1299 = vunpack.c.l.b16 %v1228
        %v1300 = vunpack.c.l.b16 %v1229
        %v1301 = vunpack.c.l.b16 %v1230
        %v1302 = vunpack.c.l.b16 %v1231
        %v1303 = vunpack.c.l.b16 %v1232
        %v1304 = vunpack.c.l.b16 %v1233
        %v1305 = vunpack.c.l.b16 %v1234
        %v1306 = vunpack.c.l.b16 %v1235
        %v1307 = vunpack.c.l.b16 %v1236
        %v1308 = vunpack.c.l.b16 %v1237
        %v1309 = vunpack.c.l.b16 %v1238
        %v1310 = vunpack.c.l.b16 %v1239
        %v1311 = vunpack.c.l.b16 %v1240
        %v1312 = vunpack.c.l.b16 %v1241
        %v1313 = vunpack.c.l.b16 %v1242
        %v1314 = vunpack.c.l.b16 %v1243
        %v1315 = vpack.c.b16 %v1284, %v1283
        %v1316 = vpack.c.b16 %v1286, %v1285
        %v1317 = vpack.c.b16 %v1288, %v1287
        %v1318 = vpack.c.b16 %v1290, %v1289
        %v1319 = vpack.c.b16 %v1292, %v1291
        %v1320 = vpack.c.b16 %v1294, %v1293
        %v1321 = vpack.c.b16 %v1296, %v1295
        %v1322 = vpack.c.b16 %v1298, %v1297
        %v1323 = vpack.c.b16 %v1300, %v1299
        %v1324 = vpack.c.b16 %v1302, %v1301
        %v1325 = vpack.c.b16 %v1304, %v1303
        %v1326 = vpack.c.b16 %v1306, %v1305
        %v1327 = vpack.c.b16 %v1308, %v1307
        %v1328 = vpack.c.b16 %v1310, %v1309
        %v1329 = vpack.c.b16 %v1312, %v1311
        %v1330 = vpack.c.b16 %v1314, %v1313
        %1347 = vmatprep.subr.bf16.mxu0 0
        %1348 = vmatpush1.bf16.msra.mxu0 %v1315
        %1349 = vmatprep.subr.bf16.mxu0 0
        %1350 = vmatpush1.bf16.msra.mxu0 %v1316
        %1351 = vmatprep.subr.bf16.mxu0 0
        %1352 = vmatpush1.bf16.msra.mxu0 %v1317
        %1353 = vmatprep.subr.bf16.mxu0 0
        %1354 = vmatpush1.bf16.msra.mxu0 %v1318
        %1355 = vmatprep.subr.bf16.mxu0 0
        %1356 = vmatpush1.bf16.msra.mxu0 %v1319
        %1357 = vmatprep.subr.bf16.mxu0 0
        %1358 = vmatpush1.bf16.msra.mxu0 %v1320
        %1359 = vmatprep.subr.bf16.mxu0 0
        %1360 = vmatpush1.bf16.msra.mxu0 %v1321
        %1361 = vmatprep.subr.bf16.mxu0 0
        %1362 = vmatpush1.bf16.msra.mxu0 %v1322
        %1363 = vmatprep.subr.bf16.mxu0 0
        %1364 = vmatpush1.bf16.msra.mxu0 %v1323
        %1365 = vmatprep.subr.bf16.mxu0 0
        %1366 = vmatpush1.bf16.msra.mxu0 %v1324
        %1367 = vmatprep.subr.bf16.mxu0 0
        %1368 = vmatpush1.bf16.msra.mxu0 %v1325
        %1369 = vmatprep.subr.bf16.mxu0 0
        %1370 = vmatpush1.bf16.msra.mxu0 %v1326
        %1371 = vmatprep.subr.bf16.mxu0 0
        %1372 = vmatpush1.bf16.msra.mxu0 %v1327
        %1373 = vmatprep.subr.bf16.mxu0 0
        %1374 = vmatpush1.bf16.msra.mxu0 %v1328
        %1375 = vmatprep.subr.bf16.mxu0 0
        %1376 = vmatpush1.bf16.msra.mxu0 %v1329
        %1377 = vmatprep.subr.bf16.mxu0 0
        %1378 = vmatpush1.bf16.msra.mxu0 %v1330
        %1379 = vmatprep.mubr.bf16.mxu0 %v1181
        %1380 = vmatmul.mubr.bf16.gmra.mrb[0].mxu0 %v1180
        %v1381 = vpop.f32.mrb[0].mxu0
        %v1382 = vadd.f32 %v1249, %v1381
        %v1383 = vpop.f32.mrb[0].mxu0
        %v1384 = vpop.f32.mrb[0].mxu0
        %v1385 = vadd.f32 %v1249, %v1384
        %v1386 = vpop.f32.mrb[0].mxu0
        %1387 = vmatprep.mubr.bf16.mxu0 %v1183
        %1388 = vmatmul.mubr.bf16.gmra.mrb[0].mxu0 %v1182
        %v1389 = vpop.f32.mrb[0].mxu0
        %v1390 = vadd.f32 %v1249, %v1389
        %v1391 = vpop.f32.mrb[0].mxu0
        %v1392 = vpop.f32.mrb[0].mxu0
        %v1393 = vadd.f32 %v1249, %v1392
        %v1394 = vpop.f32.mrb[0].mxu0
        %1395 = vmatprep.mubr.bf16.mxu0 %v1185
        %1396 = vmatmul.mubr.bf16.gmra.mrb[0].mxu0 %v1184
        %v1397 = vpop.f32.mrb[0].mxu0
        %v1398 = vadd.f32 %v1249, %v1397
        %v1399 = vpop.f32.mrb[0].mxu0
        %v1400 = vpop.f32.mrb[0].mxu0
        %v1401 = vadd.f32 %v1249, %v1400
        %v1402 = vpop.f32.mrb[0].mxu0
        %1403 = vmatprep.mubr.bf16.mxu0 %v1187
        %1404 = vmatmul.mubr.bf16.gmra.mrb[0].mxu0 %v1186
        %v1405 = vpop.f32.mrb[0].mxu0
        %v1406 = vadd.f32 %v1249, %v1405
        %v1407 = vpop.f32.mrb[0].mxu0
        %v1408 = vpop.f32.mrb[0].mxu0
        %v1409 = vadd.f32 %v1249, %v1408
        %v1410 = vpop.f32.mrb[0].mxu0
        %1411 = vmatprep.mubr.bf16.mxu0 %v1189
        %1412 = vmatmul.mubr.bf16.gmra.mrb[0].mxu0 %v1188
        %v1413 = vpop.f32.mrb[0].mxu0
        %v1414 = vadd.f32 %v1249, %v1413
        %v1415 = vpop.f32.mrb[0].mxu0
        %v1416 = vpop.f32.mrb[0].mxu0
        %v1417 = vadd.f32 %v1249, %v1416
        %v1418 = vpop.f32.mrb[0].mxu0
        %1419 = vmatprep.mubr.bf16.mxu0 %v1191
        %1420 = vmatmul.mubr.bf16.gmra.mrb[0].mxu0 %v1190
        %v1421 = vpop.f32.mrb[0].mxu0
        %v1422 = vadd.f32 %v1249, %v1421
        %v1423 = vpop.f32.mrb[0].mxu0
        %v1424 = vpop.f32.mrb[0].mxu0
        %v1425 = vadd.f32 %v1249, %v1424
        %v1426 = vpop.f32.mrb[0].mxu0
        %1427 = vmatprep.mubr.bf16.mxu0 %v1193
        %1428 = vmatmul.mubr.bf16.gmra.mrb[0].mxu0 %v1192
        %v1429 = vpop.f32.mrb[0].mxu0
        %v1430 = vadd.f32 %v1249, %v1429
        %v1431 = vpop.f32.mrb[0].mxu0
        %v1432 = vpop.f32.mrb[0].mxu0
        %v1433 = vadd.f32 %v1249, %v1432
        %v1434 = vpop.f32.mrb[0].mxu0
        %1435 = vmatprep.mubr.bf16.mxu0 %v1195
        %1436 = vmatmul.mubr.bf16.gmra.mrb[0].mxu0 %v1194
        %v1437 = vpop.f32.mrb[0].mxu0
        %v1438 = vadd.f32 %v1249, %v1437
        %v1439 = vpop.f32.mrb[0].mxu0
        %v1440 = vpop.f32.mrb[0].mxu0
        %v1441 = vadd.f32 %v1249, %v1440
        %v1442 = vpop.f32.mrb[0].mxu0
        %1443 = vmatprep.mubr.bf16.mxu0 %v1197
        %1444 = vmatmul.mubr.bf16.gmra.mrb[0].mxu0 %v1196
        %v1445 = vpop.f32.mrb[0].mxu0
        %v1446 = vadd.f32 %v1249, %v1445
        %v1447 = vpop.f32.mrb[0].mxu0
        %v1448 = vpop.f32.mrb[0].mxu0
        %v1449 = vadd.f32 %v1249, %v1448
        %v1450 = vpop.f32.mrb[0].mxu0
        %1451 = vmatprep.mubr.bf16.mxu0 %v1199
        %1452 = vmatmul.mubr.bf16.gmra.mrb[0].mxu0 %v1198
        %v1453 = vpop.f32.mrb[0].mxu0
        %v1454 = vadd.f32 %v1249, %v1453
        %v1455 = vpop.f32.mrb[0].mxu0
        %v1456 = vpop.f32.mrb[0].mxu0
        %v1457 = vadd.f32 %v1249, %v1456
        %v1458 = vpop.f32.mrb[0].mxu0
        %1459 = vmatprep.mubr.bf16.mxu0 %v1201
        %1460 = vmatmul.mubr.bf16.gmra.mrb[0].mxu0 %v1200
        %v1461 = vpop.f32.mrb[0].mxu0
        %v1462 = vadd.f32 %v1249, %v1461
        %v1463 = vpop.f32.mrb[0].mxu0
        %v1464 = vpop.f32.mrb[0].mxu0
        %v1465 = vadd.f32 %v1249, %v1464
        %v1466 = vpop.f32.mrb[0].mxu0
        %1467 = vmatprep.mubr.bf16.mxu0 %v1203
        %1468 = vmatmul.mubr.bf16.gmra.mrb[0].mxu0 %v1202
        %v1469 = vpop.f32.mrb[0].mxu0
        %v1470 = vadd.f32 %v1249, %v1469
        %v1471 = vpop.f32.mrb[0].mxu0
        %v1472 = vpop.f32.mrb[0].mxu0
        %v1473 = vadd.f32 %v1249, %v1472
        %v1474 = vpop.f32.mrb[0].mxu0
        %1475 = vmatprep.mubr.bf16.mxu0 %v1205
        %1476 = vmatmul.mubr.bf16.gmra.mrb[0].mxu0 %v1204
        %v1477 = vpop.f32.mrb[0].mxu0
        %v1478 = vadd.f32 %v1249, %v1477
        %v1479 = vpop.f32.mrb[0].mxu0
        %v1480 = vpop.f32.mrb[0].mxu0
        %v1481 = vadd.f32 %v1249, %v1480
        %v1482 = vpop.f32.mrb[0].mxu0
        %1483 = vmatprep.mubr.bf16.mxu0 %v1207
        %1484 = vmatmul.mubr.bf16.gmra.mrb[0].mxu0 %v1206
        %v1485 = vpop.f32.mrb[0].mxu0
        %v1486 = vadd.f32 %v1249, %v1485
        %v1487 = vpop.f32.mrb[0].mxu0
        %v1488 = vpop.f32.mrb[0].mxu0
        %v1489 = vadd.f32 %v1249, %v1488
        %v1490 = vpop.f32.mrb[0].mxu0
        %1491 = vmatprep.mubr.bf16.mxu0 %v1209
        %1492 = vmatmul.mubr.bf16.gmra.mrb[0].mxu0 %v1208
        %v1493 = vpop.f32.mrb[0].mxu0
        %v1494 = vadd.f32 %v1249, %v1493
        %v1495 = vpop.f32.mrb[0].mxu0
        %v1496 = vpop.f32.mrb[0].mxu0
        %v1497 = vadd.f32 %v1249, %v1496
        %v1498 = vpop.f32.mrb[0].mxu0
        %1499 = vmatprep.mubr.bf16.mxu0 %v1211
        %1500 = vmatmul.mubr.bf16.gmra.mrb[0].mxu0 %v1210
        %v1501 = vpop.f32.mrb[0].mxu0
        %v1502 = vadd.f32 %v1249, %v1501
        %v1503 = vpop.f32.mrb[0].mxu0
        %v1504 = vpop.f32.mrb[0].mxu0
        %v1505 = vadd.f32 %v1249, %v1504
        %v1506 = vpop.f32.mrb[0].mxu0
        %1507 = vdwg.mxu0
        %vm1508 = vcmask 220160
        %1509 = vst.msk [vmem:[%s280] sm:$0xff] %vm1508, %v1382
        %1510 = vst.msk [vmem:[%s280 + $0x8] sm:$0xff] %vm1508, %v1385
        %1511 = vst.msk [vmem:[%s280 + $0x10] sm:$0xff] %vm1508, %v1390
        %1512 = vst.msk [vmem:[%s280 + $0x18] sm:$0xff] %vm1508, %v1393
        %1513 = vst.msk [vmem:[%s280 + $0x20] sm:$0xff] %vm1508, %v1398
        %1514 = vst.msk [vmem:[%s280 + $0x28] sm:$0xff] %vm1508, %v1401
        %1515 = vst.msk [vmem:[%s280 + $0x30] sm:$0xff] %vm1508, %v1406
        %1516 = vst.msk [vmem:[%s280 + $0x38] sm:$0xff] %vm1508, %v1409
        %1517 = vst.msk [vmem:[%s280 + $0x40] sm:$0xff] %vm1508, %v1414
        %1518 = vst.msk [vmem:[%s280 + $0x48] sm:$0xff] %vm1508, %v1417
        %1519 = vst.msk [vmem:[%s280 + $0x50] sm:$0xff] %vm1508, %v1422
        %1520 = vst.msk [vmem:[%s280 + $0x58] sm:$0xff] %vm1508, %v1425
        %1521 = vst.msk [vmem:[%s280 + $0x60] sm:$0xff] %vm1508, %v1430
        %1522 = vst.msk [vmem:[%s280 + $0x68] sm:$0xff] %vm1508, %v1433
        %1523 = vst.msk [vmem:[%s280 + $0x70] sm:$0xff] %vm1508, %v1438
        %1524 = vst.msk [vmem:[%s280 + $0x78] sm:$0xff] %vm1508, %v1441
        %1525 = vst.msk [vmem:[%s280 + $0x80] sm:$0xff] %vm1508, %v1446
        %1526 = vst.msk [vmem:[%s280 + $0x88] sm:$0xff] %vm1508, %v1449
        %1527 = vst.msk [vmem:[%s280 + $0x90] sm:$0xff] %vm1508, %v1454
        %1528 = vst.msk [vmem:[%s280 + $0x98] sm:$0xff] %vm1508, %v1457
        %1529 = vst.msk [vmem:[%s280 + $0xa0] sm:$0xff] %vm1508, %v1462
        %1530 = vst.msk [vmem:[%s280 + $0xa8] sm:$0xff] %vm1508, %v1465
        %1531 = vst.msk [vmem:[%s280 + $0xb0] sm:$0xff] %vm1508, %v1470
        %1532 = vst.msk [vmem:[%s280 + $0xb8] sm:$0xff] %vm1508, %v1473
        %1533 = vst.msk [vmem:[%s280 + $0xc0] sm:$0xff] %vm1508, %v1478
        %1534 = vst.msk [vmem:[%s280 + $0xc8] sm:$0xff] %vm1508, %v1481
        %1535 = vst.msk [vmem:[%s280 + $0xd0] sm:$0xff] %vm1508, %v1486
        %1536 = vst.msk [vmem:[%s280 + $0xd8] sm:$0xff] %vm1508, %v1489
        %1537 = vst.msk [vmem:[%s280 + $0xe0] sm:$0xff] %vm1508, %v1494
        %1538 = vst.msk [vmem:[%s280 + $0xe8] sm:$0xff] %vm1508, %v1497
        %1539 = vst.msk [vmem:[%s280 + $0xf0] sm:$0xff] %vm1508, %v1502
        %1540 = vst.msk [vmem:[%s280 + $0xf8] sm:$0xff] %vm1508, %v1505
        %s1541 = sand.u32 %s178, 1
        %s1542 = sand.u32 %s178, 1
        %s1543 = smul.addr %s1542, 256
        %s1544 = scalar_lea.vmem [#allocation2], %s1543
        // Predicated region
        $region49: #{tpu_custom_call.1} parent=47 // pred_check
          %p1545 = pneg %p188
        $region50: #{tpu_custom_call.1} parent=47 // pred_check_branch
          %1547 = sbr.rel (%p1545) target = $region52
        $region51: #{tpu_custom_call.1} parent=47 // pred_region
          %s1548 = smul.u32 32, %s18
          %s1549 = ssub.s32 75, %s1548
          %p1550 = scmp.lt.s32.totalorder %s1549, 32
          %s1551 = scalar_select %p1550, %s1549, 32
          %s1552 = smul.u32 128, %s1551
          %p1553 = scmp.ne.s32.totalorder 0, %s1552
          %s1554 = smul.addr %s1548, 8
          %s1555 = scalar_lea.vmem %s7, %s1554
          // Predicated region
          $region53: #{tpu_custom_call.1} parent=51 // pred_check
            %p1556 = pneg %p1553
          $region54: #{tpu_custom_call.1} parent=51 // pred_check_branch
            %1558 = sbr.rel (%p1556) target = $region56
          $region55: #{tpu_custom_call.1} parent=51 // pred_region
            // Predicated region
            $region57: #{tpu_custom_call.1} parent=55 // pred_check
              _
            $region58: #{tpu_custom_call.1} parent=55 // pred_check_branch
              %1560 = sbr.rel (0) target = $region60
            $region59: #{tpu_custom_call.1} parent=55 // pred_region
              // Predicated region
              $region79: #{tpu_custom_call.1} parent=59 // pred_check
                _
              $region80: #{tpu_custom_call.1} parent=59 // pred_check_branch
                %1671 = sbr.rel (0) target = $region82
              $region81: #{tpu_custom_call.1} parent=59 // pred_region
                %s1672 = sshrl.u32 %s1551, 5
                // While loop
                $region83: #{tpu_custom_call.1} parent=81 // loop_pre_header
                  _
                $region84: #{tpu_custom_call.1} parent=81 // loop_header
                  %s1674 = sphi 0, %s1676
                  %p1675 = scmp.ge.s32.totalorder %s1674, %s1672
                  %s1679 = sphi 0, %s1748
                  %s1680 = sphi %s1544, %s1751
                  %s1681 = sphi %s1555, %s1752
                $region85: #{tpu_custom_call.1} parent=81 // loop_header_branch
                  %1678 = sbr.rel (%p1675) target = $region89
                $region86: #{tpu_custom_call.1} parent=81 // loop_body
                  %v1682 = vld [vmem:[%s1680] sm:$0xff]
                  %1683 = vst [vmem:[%s1681] sm:$0xff] %v1682
                  %v1684 = vld [vmem:[%s1680 + $0x8] sm:$0xff]
                  %1685 = vst [vmem:[%s1681 + $0x8] sm:$0xff] %v1684
                  %v1686 = vld [vmem:[%s1680 + $0x10] sm:$0xff]
                  %1687 = vst [vmem:[%s1681 + $0x10] sm:$0xff] %v1686
                  %v1688 = vld [vmem:[%s1680 + $0x18] sm:$0xff]
                  %1689 = vst [vmem:[%s1681 + $0x18] sm:$0xff] %v1688
                  %v1690 = vld [vmem:[%s1680 + $0x20] sm:$0xff]
                  %1691 = vst [vmem:[%s1681 + $0x20] sm:$0xff] %v1690
                  %v1692 = vld [vmem:[%s1680 + $0x28] sm:$0xff]
                  %1693 = vst [vmem:[%s1681 + $0x28] sm:$0xff] %v1692
                  %v1694 = vld [vmem:[%s1680 + $0x30] sm:$0xff]
                  %1695 = vst [vmem:[%s1681 + $0x30] sm:$0xff] %v1694
                  %v1696 = vld [vmem:[%s1680 + $0x38] sm:$0xff]
                  %1697 = vst [vmem:[%s1681 + $0x38] sm:$0xff] %v1696
                  %v1698 = vld [vmem:[%s1680 + $0x40] sm:$0xff]
                  %1699 = vst [vmem:[%s1681 + $0x40] sm:$0xff] %v1698
                  %v1700 = vld [vmem:[%s1680 + $0x48] sm:$0xff]
                  %1701 = vst [vmem:[%s1681 + $0x48] sm:$0xff] %v1700
                  %v1702 = vld [vmem:[%s1680 + $0x50] sm:$0xff]
                  %1703 = vst [vmem:[%s1681 + $0x50] sm:$0xff] %v1702
                  %v1704 = vld [vmem:[%s1680 + $0x58] sm:$0xff]
                  %1705 = vst [vmem:[%s1681 + $0x58] sm:$0xff] %v1704
                  %v1706 = vld [vmem:[%s1680 + $0x60] sm:$0xff]
                  %1707 = vst [vmem:[%s1681 + $0x60] sm:$0xff] %v1706
                  %v1708 = vld [vmem:[%s1680 + $0x68] sm:$0xff]
                  %1709 = vst [vmem:[%s1681 + $0x68] sm:$0xff] %v1708
                  %v1710 = vld [vmem:[%s1680 + $0x70] sm:$0xff]
                  %1711 = vst [vmem:[%s1681 + $0x70] sm:$0xff] %v1710
                  %v1712 = vld [vmem:[%s1680 + $0x78] sm:$0xff]
                  %1713 = vst [vmem:[%s1681 + $0x78] sm:$0xff] %v1712
                  %v1714 = vld [vmem:[%s1680 + $0x80] sm:$0xff]
                  %1715 = vst [vmem:[%s1681 + $0x80] sm:$0xff] %v1714
                  %v1716 = vld [vmem:[%s1680 + $0x88] sm:$0xff]
                  %1717 = vst [vmem:[%s1681 + $0x88] sm:$0xff] %v1716
                  %v1718 = vld [vmem:[%s1680 + $0x90] sm:$0xff]
                  %1719 = vst [vmem:[%s1681 + $0x90] sm:$0xff] %v1718
                  %v1720 = vld [vmem:[%s1680 + $0x98] sm:$0xff]
                  %1721 = vst [vmem:[%s1681 + $0x98] sm:$0xff] %v1720
                  %v1722 = vld [vmem:[%s1680 + $0xa0] sm:$0xff]
                  %1723 = vst [vmem:[%s1681 + $0xa0] sm:$0xff] %v1722
                  %v1724 = vld [vmem:[%s1680 + $0xa8] sm:$0xff]
                  %1725 = vst [vmem:[%s1681 + $0xa8] sm:$0xff] %v1724
                  %v1726 = vld [vmem:[%s1680 + $0xb0] sm:$0xff]
                  %1727 = vst [vmem:[%s1681 + $0xb0] sm:$0xff] %v1726
                  %v1728 = vld [vmem:[%s1680 + $0xb8] sm:$0xff]
                  %1729 = vst [vmem:[%s1681 + $0xb8] sm:$0xff] %v1728
                  %v1730 = vld [vmem:[%s1680 + $0xc0] sm:$0xff]
                  %1731 = vst [vmem:[%s1681 + $0xc0] sm:$0xff] %v1730
                  %v1732 = vld [vmem:[%s1680 + $0xc8] sm:$0xff]
                  %1733 = vst [vmem:[%s1681 + $0xc8] sm:$0xff] %v1732
                  %v1734 = vld [vmem:[%s1680 + $0xd0] sm:$0xff]
                  %1735 = vst [vmem:[%s1681 + $0xd0] sm:$0xff] %v1734
                  %v1736 = vld [vmem:[%s1680 + $0xd8] sm:$0xff]
                  %1737 = vst [vmem:[%s1681 + $0xd8] sm:$0xff] %v1736
                  %v1738 = vld [vmem:[%s1680 + $0xe0] sm:$0xff]
                  %1739 = vst [vmem:[%s1681 + $0xe0] sm:$0xff] %v1738
                  %v1740 = vld [vmem:[%s1680 + $0xe8] sm:$0xff]
                  %1741 = vst [vmem:[%s1681 + $0xe8] sm:$0xff] %v1740
                  %v1742 = vld [vmem:[%s1680 + $0xf0] sm:$0xff]
                  %1743 = vst [vmem:[%s1681 + $0xf0] sm:$0xff] %v1742
                  %v1744 = vld [vmem:[%s1680 + $0xf8] sm:$0xff]
                  %1745 = vst [vmem:[%s1681 + $0xf8] sm:$0xff] %v1744
                  %s1746 = sadd.s32 1, %s1679
                  %p1747 = scmp.ge.s32.totalorder %s1746, %s1672
                  %s1748 = scalar_select %p1747, 0, %s1746
                  %s1749 = smul.u32 %s1748, 256
                  %s1750 = smul.u32 %s1748, 256
                  %s1751 = scalar_lea.vmem %s1544, %s1749 [#allocation2]
                  %s1752 = scalar_lea.vmem %s1555, %s1750
                $region87: #{tpu_custom_call.1} parent=81 // loop_footer
                  %s1676 = sadd.s32 %s1674, 1
                $region88: #{tpu_custom_call.1} parent=81 // loop_footer_branch
                  %1673 = sbr.rel target = $region84
                $region89: #{tpu_custom_call.1} parent=81 // loop_exit
                  _
                %s1753 = sshrl.u32 %s1551, 5
                %s1754 = sand.u32 %s1551, 31
                %s1755 = smul.u32 %s1753, 32
                %s1756 = smul.u32 8, %s1755
                %s1757 = scalar_lea.vmem %s1544, %s1756 [#allocation2]
                %s1758 = smul.u32 8, %s1755
                %s1759 = scalar_lea.vmem %s1555, %s1758
                // While loop
                $region90: #{tpu_custom_call.1} parent=81 // loop_pre_header
                  _
                $region91: #{tpu_custom_call.1} parent=81 // loop_header
                  %s1761 = sphi 0, %s1763
                  %p1762 = scmp.ge.s32.totalorder %s1761, %s1754
                  %s1766 = sphi 0, %s1773
                  %s1767 = sphi %s1757, %s1776
                  %s1768 = sphi %s1759, %s1777
                $region92: #{tpu_custom_call.1} parent=81 // loop_header_branch
                  %1765 = sbr.rel (%p1762) target = $region96
                $region93: #{tpu_custom_call.1} parent=81 // loop_body
                  %v1769 = vld [vmem:[%s1767] sm:$0xff]
                  %1770 = vst [vmem:[%s1768] sm:$0xff] %v1769
                  %s1771 = sadd.s32 1, %s1766
                  %p1772 = scmp.ge.s32.totalorder %s1771, %s1754
                  %s1773 = scalar_select %p1772, 0, %s1771
                  %s1774 = smul.u32 %s1773, 8
                  %s1775 = smul.u32 %s1773, 8
                  %s1776 = scalar_lea.vmem %s1757, %s1774 [#allocation2]
                  %s1777 = scalar_lea.vmem %s1759, %s1775
                $region94: #{tpu_custom_call.1} parent=81 // loop_footer
                  %s1763 = sadd.s32 %s1761, 1
                $region95: #{tpu_custom_call.1} parent=81 // loop_footer_branch
                  %1760 = sbr.rel target = $region91
                $region96: #{tpu_custom_call.1} parent=81 // loop_exit
                  _
              $region82: #{tpu_custom_call.1} parent=59 // pred_fallthru
                _
              // Predicated region
              $region97: #{tpu_custom_call.1} parent=59 // pred_check
                _
              $region98: #{tpu_custom_call.1} parent=59 // pred_check_branch
                %1779 = sbr.rel target = $region100
              $region99: #{tpu_custom_call.1} parent=59 // pred_region
                _
              $region100: #{tpu_custom_call.1} parent=59 // pred_fallthru
                _
            $region60: #{tpu_custom_call.1} parent=55 // pred_fallthru
              _
            // Predicated region
            $region61: #{tpu_custom_call.1} parent=55 // pred_check
              _
            $region62: #{tpu_custom_call.1} parent=55 // pred_check_branch
              %1562 = sbr.rel target = $region64
            $region63: #{tpu_custom_call.1} parent=55 // pred_region
              %s1564 = sshrl.u32 %s1551, 5
              // While loop
              $region65: #{tpu_custom_call.1} parent=63 // loop_pre_header
                _
              $region66: #{tpu_custom_call.1} parent=63 // loop_header
                %s1566 = sphi 0, %s1568
                %p1567 = scmp.ge.s32.totalorder %s1566, %s1564
                %s1571 = sphi 0, %s1640
                %s1572 = sphi %s1544, %s1643
                %s1573 = sphi %s1555, %s1644
              $region67: #{tpu_custom_call.1} parent=63 // loop_header_branch
                %1570 = sbr.rel (%p1567) target = $region71
              $region68: #{tpu_custom_call.1} parent=63 // loop_body
                %v1574 = vld [vmem:[%s1572] sm:$0xff]
                %1575 = vst [vmem:[%s1573] sm:$0xff] %v1574
                %v1576 = vld [vmem:[%s1572 + $0x8] sm:$0xff]
                %1577 = vst [vmem:[%s1573 + $0x8] sm:$0xff] %v1576
                %v1578 = vld [vmem:[%s1572 + $0x10] sm:$0xff]
                %1579 = vst [vmem:[%s1573 + $0x10] sm:$0xff] %v1578
                %v1580 = vld [vmem:[%s1572 + $0x18] sm:$0xff]
                %1581 = vst [vmem:[%s1573 + $0x18] sm:$0xff] %v1580
                %v1582 = vld [vmem:[%s1572 + $0x20] sm:$0xff]
                %1583 = vst [vmem:[%s1573 + $0x20] sm:$0xff] %v1582
                %v1584 = vld [vmem:[%s1572 + $0x28] sm:$0xff]
                %1585 = vst [vmem:[%s1573 + $0x28] sm:$0xff] %v1584
                %v1586 = vld [vmem:[%s1572 + $0x30] sm:$0xff]
                %1587 = vst [vmem:[%s1573 + $0x30] sm:$0xff] %v1586
                %v1588 = vld [vmem:[%s1572 + $0x38] sm:$0xff]
                %1589 = vst [vmem:[%s1573 + $0x38] sm:$0xff] %v1588
                %v1590 = vld [vmem:[%s1572 + $0x40] sm:$0xff]
                %1591 = vst [vmem:[%s1573 + $0x40] sm:$0xff] %v1590
                %v1592 = vld [vmem:[%s1572 + $0x48] sm:$0xff]
                %1593 = vst [vmem:[%s1573 + $0x48] sm:$0xff] %v1592
                %v1594 = vld [vmem:[%s1572 + $0x50] sm:$0xff]
                %1595 = vst [vmem:[%s1573 + $0x50] sm:$0xff] %v1594
                %v1596 = vld [vmem:[%s1572 + $0x58] sm:$0xff]
                %1597 = vst [vmem:[%s1573 + $0x58] sm:$0xff] %v1596
                %v1598 = vld [vmem:[%s1572 + $0x60] sm:$0xff]
                %1599 = vst [vmem:[%s1573 + $0x60] sm:$0xff] %v1598
                %v1600 = vld [vmem:[%s1572 + $0x68] sm:$0xff]
                %1601 = vst [vmem:[%s1573 + $0x68] sm:$0xff] %v1600
                %v1602 = vld [vmem:[%s1572 + $0x70] sm:$0xff]
                %1603 = vst [vmem:[%s1573 + $0x70] sm:$0xff] %v1602
                %v1604 = vld [vmem:[%s1572 + $0x78] sm:$0xff]
                %1605 = vst [vmem:[%s1573 + $0x78] sm:$0xff] %v1604
                %v1606 = vld [vmem:[%s1572 + $0x80] sm:$0xff]
                %1607 = vst [vmem:[%s1573 + $0x80] sm:$0xff] %v1606
                %v1608 = vld [vmem:[%s1572 + $0x88] sm:$0xff]
                %1609 = vst [vmem:[%s1573 + $0x88] sm:$0xff] %v1608
                %v1610 = vld [vmem:[%s1572 + $0x90] sm:$0xff]
                %1611 = vst [vmem:[%s1573 + $0x90] sm:$0xff] %v1610
                %v1612 = vld [vmem:[%s1572 + $0x98] sm:$0xff]
                %1613 = vst [vmem:[%s1573 + $0x98] sm:$0xff] %v1612
                %v1614 = vld [vmem:[%s1572 + $0xa0] sm:$0xff]
                %1615 = vst [vmem:[%s1573 + $0xa0] sm:$0xff] %v1614
                %v1616 = vld [vmem:[%s1572 + $0xa8] sm:$0xff]
                %1617 = vst [vmem:[%s1573 + $0xa8] sm:$0xff] %v1616
                %v1618 = vld [vmem:[%s1572 + $0xb0] sm:$0xff]
                %1619 = vst [vmem:[%s1573 + $0xb0] sm:$0xff] %v1618
                %v1620 = vld [vmem:[%s1572 + $0xb8] sm:$0xff]
                %1621 = vst [vmem:[%s1573 + $0xb8] sm:$0xff] %v1620
                %v1622 = vld [vmem:[%s1572 + $0xc0] sm:$0xff]
                %1623 = vst [vmem:[%s1573 + $0xc0] sm:$0xff] %v1622
                %v1624 = vld [vmem:[%s1572 + $0xc8] sm:$0xff]
                %1625 = vst [vmem:[%s1573 + $0xc8] sm:$0xff] %v1624
                %v1626 = vld [vmem:[%s1572 + $0xd0] sm:$0xff]
                %1627 = vst [vmem:[%s1573 + $0xd0] sm:$0xff] %v1626
                %v1628 = vld [vmem:[%s1572 + $0xd8] sm:$0xff]
                %1629 = vst [vmem:[%s1573 + $0xd8] sm:$0xff] %v1628
                %v1630 = vld [vmem:[%s1572 + $0xe0] sm:$0xff]
                %1631 = vst [vmem:[%s1573 + $0xe0] sm:$0xff] %v1630
                %v1632 = vld [vmem:[%s1572 + $0xe8] sm:$0xff]
                %1633 = vst [vmem:[%s1573 + $0xe8] sm:$0xff] %v1632
                %v1634 = vld [vmem:[%s1572 + $0xf0] sm:$0xff]
                %1635 = vst [vmem:[%s1573 + $0xf0] sm:$0xff] %v1634
                %v1636 = vld [vmem:[%s1572 + $0xf8] sm:$0xff]
                %1637 = vst [vmem:[%s1573 + $0xf8] sm:$0xff] %v1636
                %s1638 = sadd.s32 1, %s1571
                %p1639 = scmp.ge.s32.totalorder %s1638, %s1564
                %s1640 = scalar_select %p1639, 0, %s1638
                %s1641 = smul.u32 %s1640, 256
                %s1642 = smul.u32 %s1640, 256
                %s1643 = scalar_lea.vmem %s1544, %s1641 [#allocation2]
                %s1644 = scalar_lea.vmem %s1555, %s1642
              $region69: #{tpu_custom_call.1} parent=63 // loop_footer
                %s1568 = sadd.s32 %s1566, 1
              $region70: #{tpu_custom_call.1} parent=63 // loop_footer_branch
                %1565 = sbr.rel target = $region66
              $region71: #{tpu_custom_call.1} parent=63 // loop_exit
                _
              %s1645 = sshrl.u32 %s1551, 5
              %s1646 = sand.u32 %s1551, 31
              %s1647 = smul.u32 %s1645, 32
              %s1648 = smul.u32 8, %s1647
              %s1649 = scalar_lea.vmem %s1544, %s1648 [#allocation2]
              %s1650 = smul.u32 8, %s1647
              %s1651 = scalar_lea.vmem %s1555, %s1650
              // While loop
              $region72: #{tpu_custom_call.1} parent=63 // loop_pre_header
                _
              $region73: #{tpu_custom_call.1} parent=63 // loop_header
                %s1653 = sphi 0, %s1655
                %p1654 = scmp.ge.s32.totalorder %s1653, %s1646
                %s1658 = sphi 0, %s1665
                %s1659 = sphi %s1649, %s1668
                %s1660 = sphi %s1651, %s1669
              $region74: #{tpu_custom_call.1} parent=63 // loop_header_branch
                %1657 = sbr.rel (%p1654) target = $region78
              $region75: #{tpu_custom_call.1} parent=63 // loop_body
                %v1661 = vld [vmem:[%s1659] sm:$0xff]
                %1662 = vst [vmem:[%s1660] sm:$0xff] %v1661
                %s1663 = sadd.s32 1, %s1658
                %p1664 = scmp.ge.s32.totalorder %s1663, %s1646
                %s1665 = scalar_select %p1664, 0, %s1663
                %s1666 = smul.u32 %s1665, 8
                %s1667 = smul.u32 %s1665, 8
                %s1668 = scalar_lea.vmem %s1649, %s1666 [#allocation2]
                %s1669 = scalar_lea.vmem %s1651, %s1667
              $region76: #{tpu_custom_call.1} parent=63 // loop_footer
                %s1655 = sadd.s32 %s1653, 1
              $region77: #{tpu_custom_call.1} parent=63 // loop_footer_branch
                %1652 = sbr.rel target = $region73
              $region78: #{tpu_custom_call.1} parent=63 // loop_exit
                _
            $region64: #{tpu_custom_call.1} parent=55 // pred_fallthru
              _
          $region56: #{tpu_custom_call.1} parent=51 // pred_fallthru
            _
          %1780 = vnop
        $region52: #{tpu_custom_call.1} parent=47 // pred_fallthru
          _
      $region48: #{tpu_custom_call.1} parent=5 // pred_fallthru
        _
      %p1781 = scmp.le.s32.totalorder 2, %s13
      // Predicated region
      $region101: #{tpu_custom_call.1} parent=5 // pred_check
        %p1782 = pneg %p1781
      $region102: #{tpu_custom_call.1} parent=5 // pred_check_branch
        %1784 = sbr.rel (%p1782) target = $region104
      $region103: #{tpu_custom_call.1} parent=5 // pred_region
        %s1785 = ssub.s32 %s13, 2
        // Predicated region
        $region105: #{tpu_custom_call.1} parent=103 // pred_check
          %p1786 = pneg %p194
        $region106: #{tpu_custom_call.1} parent=103 // pred_check_branch
          %1788 = sbr.rel (%p1786) target = $region108
        $region107: #{tpu_custom_call.1} parent=103 // pred_region
          %s1789 = sand.u32 %s179, 1
          %s1790 = sand.u32 %s179, 1
          %s1791 = smul.addr %s1790, 256
          %s1792 = scalar_lea.vmem [#allocation2], %s1791
        $region108: #{tpu_custom_call.1} parent=103 // pred_fallthru
          _
      $region104: #{tpu_custom_call.1} parent=5 // pred_fallthru
        _
    $region6: #{tpu_custom_call.1} parent=1 // loop_footer
      %s17 = sadd.s32 1, %s13
    $region7: #{tpu_custom_call.1} parent=1 // loop_footer_branch
      %12 = sbr.rel target = $region3
    $region8: #{tpu_custom_call.1} parent=1 // loop_exit
      _

</llo_original>
